<compile_context>
chip_gen: v7x
topology: tpu7x:2x2x1
jax: 0.10.0
libtpu: 0.0.40
codegen_flags: <defaults>
</compile_context>

<pallas_src>
import functools

import jax
import jax.numpy as jnp
from jax import lax
import numpy as np
from jax.experimental import pallas as pl
from jax.experimental.pallas import tpu as pltpu


def _round_up(x, m):
    return (x + m - 1) // m * m


# --------------------------------- kernel ----------------------------------
def _shuffle_v2_block_kernel(x2_ref, w1_ref, b1_ref, wd_ref, w2_ref, b2_ref,
                             out_ref, y1p_ref, *, W, matmul_dtype):
    """Fused ShuffleV2Block branch2 (stride=1) for a sub-batch of images.

    x2_ref  : (Bb, H, Wa, C)  branch2 input, NHWC, right-padded to Wa%8==0,
                              already in matmul_dtype
    w1_ref  : (C, C)          1x1 conv #1 weight, BN scale s1 pre-folded
    b1_ref  : (1, C)          folded BN bias after conv #1 (f32)
    wd_ref  : (3, 3, C)       depthwise 3x3 weight, DW-BN scale pre-folded
    w2_ref  : (C, C)          1x1 conv #2 weight, BN scale s2 pre-folded
    b2_ref  : (1, C)          folded bias (DW-BN bias folded through w2) (f32)
    out_ref : (Bb, H, Wa, C)  branch2 output (cols >= W are discarded outside)
    y1p_ref : (Bb, H+2, Wa+2, C) f32 VMEM scratch, padded conv-#1 activations
    """
    Bb, H, Wa, C = x2_ref.shape
    Hp, Ws = y1p_ref.shape[1], y1p_ref.shape[2]

    # ---- 1x1 conv #1 (BN scale folded into w1) + bias + ReLU ---------------
    x2 = x2_ref[...].reshape(Bb * H * Wa, C)
    y1 = jnp.dot(x2, w1_ref[...], preferred_element_type=jnp.float32)
    y1 = jnp.maximum(y1 + b1_ref[...], 0.0).reshape(Bb, H, Wa, C)

    # ---- refresh the zero halo of the padded scratch (4 tiny slice stores,
    #      done every step -> safe under megacore grid sharding), then write
    #      the true interior.  Alignment junk columns (>= W) are NOT stored. --
    y1p_ref[:, 0:1, :, :] = jnp.zeros((Bb, 1, Ws, C), jnp.float32)
    y1p_ref[:, H + 1:H + 2, :, :] = jnp.zeros((Bb, 1, Ws, C), jnp.float32)
    y1p_ref[:, :, 0:1, :] = jnp.zeros((Bb, Hp, 1, C), jnp.float32)
    y1p_ref[:, :, W + 1:Ws, :] = jnp.zeros((Bb, Hp, Ws - W - 1, C), jnp.float32)
    y1p_ref[:, 1:H + 1, 1:W + 1, :] = y1[:, :, :W, :]

    # ---- depthwise 3x3 (stride 1, pad 1): 9 shifted-slice FMAs in f32 ------
    y1p = y1p_ref[...]
    wd = wd_ref[...]                              # hoisted once, (3, 3, C)
    acc = y1p[:, 0:H, 0:Wa, :] * wd[0, 0, :]
    for kh in range(3):
        for kw in range(3):
            if kh == 0 and kw == 0:
                continue
            acc = acc + y1p[:, kh:kh + H, kw:kw + Wa, :] * wd[kh, kw, :]

    # ---- 1x1 conv #2 (BN scale + DW-BN bias pre-folded) + bias + ReLU ------
    y3 = jnp.dot(acc.reshape(Bb * H * Wa, C).astype(matmul_dtype), w2_ref[...],
                 preferred_element_type=jnp.float32)
    y3 = jnp.maximum(y3 + b2_ref[...], 0.0)
    out_ref[...] = y3.reshape(Bb, H, Wa, C).astype(out_ref.dtype)


# --------------------------------- wrapper ---------------------------------
def _vmem_capacity_bytes():
    try:
        return int(pltpu.get_tpu_info().vmem_capacity_bytes)
    except Exception:
        return 64 << 20     # conservative fallback (v7x per-TensorCore VMEM)


def _pick_sub_batch(B, H, W, C, in_itemsize, budget_bytes, min_steps=4):
    """Largest divisor of B whose working set fits the VMEM budget while
    keeping >= min_steps grid steps (DMA overlap; >=2 blocks for v7x's TCs)."""
    Hp, Wa = H + 2, _round_up(W, 8)
    Ws = Wa + 2
    lane = lambda c: _round_up(max(c, 1), 128)
    sub = lambda s: _round_up(max(s, 1), 8)
    in_plane = H * sub(Wa) * lane(C) * in_itemsize      # x2 input block
    out_plane = H * sub(Wa) * lane(C) * 4               # output block
    pad_plane = Hp * sub(Ws) * lane(C) * 4              # padded f32 plane
    # 2x double-buffered in/out blocks + persistent scratch + ~5 live f32
    # intermediates (y1, acc, shifted-slice temps, matmul-dtype cast).
    per_img = 2 * in_plane + 2 * out_plane + 6 * pad_plane
    bb = min(B, max(1, budget_bytes // max(per_img, 1)))
    bb = min(bb, max(1, B // min(B, min_steps)))
    while B % bb:
        bb -= 1
    return bb


def shuffle_v2_block_stride1(x_nchw, params, *, matmul_dtype=jnp.bfloat16,
                             sub_batch=None):
    """ShuffleV2Block forward, stride=1 (inp == oup). NCHW in / NCHW out."""
    B, Cin, H, W = x_nchw.shape
    C = Cin // 2                          # branch_features
    Wa = _round_up(W, 8)                  # sublane-aligned width
    Hp, Ws = H + 2, Wa + 2

    # ---- trace-time parameter folding (tiny tensors, zero runtime cost) ----
    w1_f = (params["w1"] * params["s1"]).astype(matmul_dtype)        # s1 -> w1
    wd_f = params["wd"] * params["sd"].reshape(1, 1, C)              # sd -> taps
    w2_f = params["w2"] * params["s2"]                               # s2 -> w2
    b2_f = params["b2"] + jnp.dot(params["bd"], w2_f)                # bd -> b2
    w2_f = w2_f.astype(matmul_dtype)

    # ---- layout glue (would disappear in an NHWC-native network) -----------
    x2 = jnp.transpose(x_nchw[:, C:], (0, 2, 3, 1))                  # (B,H,W,C)
    x2a = jnp.pad(x2, ((0, 0), (0, 0), (0, Wa - W), (0, 0))).astype(matmul_dtype)

    cap = _vmem_capacity_bytes()
    Bb = sub_batch or _pick_sub_batch(B, H, W, C,
                                      jnp.dtype(matmul_dtype).itemsize,
                                      budget_bytes=int(cap * 0.40))
    assert B % Bb == 0, (B, Bb)

    kernel = functools.partial(_shuffle_v2_block_kernel, W=W,
                               matmul_dtype=matmul_dtype)
    full = lambda *shape: pl.BlockSpec(shape, lambda b: (0,) * len(shape))

    y2 = pl.pallas_call(
        kernel,
        out_shape=jax.ShapeDtypeStruct((B, H, Wa, C), jnp.float32),
        grid_spec=pltpu.PrefetchScalarGridSpec(
            num_scalar_prefetch=0,
            grid=(B // Bb,),
            in_specs=[
                pl.BlockSpec((Bb, H, Wa, C), lambda b: (b, 0, 0, 0)),  # x2
                full(C, C),       # w1 (s1 folded)
                full(1, C),       # b1
                full(3, 3, C),    # wd (sd folded)
                full(C, C),       # w2 (s2 folded)
                full(1, C),       # b2 (bd folded through w2)
            ],
            out_specs=pl.BlockSpec((Bb, H, Wa, C), lambda b: (b, 0, 0, 0)),
            scratch_shapes=[pltpu.VMEM((Bb, Hp, Ws, C), jnp.float32)],
        ),
        compiler_params=pltpu.CompilerParams(
            dimension_semantics=("parallel",),
            vmem_limit_bytes=int(min(cap * 0.85, 112 << 20)),
        ),
    )(x2a, w1_f, params["b1"], wd_f, w2_f, b2_f)

    # concat(x1, branch2) + channel_shuffle(groups=2) == channel interleave,
    # realised with the single NHWC->NCHW transpose the interface needs.
    x1 = x_nchw[:, :C]                                       # (B, C, H, W)
    y2_nchw = jnp.transpose(y2[:, :, :W, :], (0, 3, 1, 2))   # (B, C, H, W)
    return jnp.stack([x1, y2_nchw], axis=2).reshape(B, 2 * C, H, W)


# ---------------------- pure-JAX reference (lax.conv) ----------------------
def reference_shuffle_v2_block(x_nchw, params):
    B, Cin, H, W = x_nchw.shape
    C = Cin // 2
    x1 = x_nchw[:, :C]
    x2 = jnp.transpose(x_nchw[:, C:], (0, 2, 3, 1))  # NHWC

    dn_pw = lax.conv_dimension_numbers(x2.shape, (1, 1, C, C),
                                       ("NHWC", "HWIO", "NHWC"))
    dn_dw = lax.conv_dimension_numbers(x2.shape, (3, 3, 1, C),
                                       ("NHWC", "HWIO", "NHWC"))

    def bn(y, s, b):
        return y * s.reshape(1, 1, 1, C) + b.reshape(1, 1, 1, C)

    y = lax.conv_general_dilated(x2, params["w1"].reshape(1, 1, C, C),
                                 (1, 1), "VALID", dimension_numbers=dn_pw)
    y = jnp.maximum(bn(y, params["s1"], params["b1"]), 0.0)

    y = lax.conv_general_dilated(y, params["wd"][:, :, None, :],
                                 (1, 1), ((1, 1), (1, 1)),
                                 dimension_numbers=dn_dw,
                                 feature_group_count=C)
    y = bn(y, params["sd"], params["bd"])

    y = lax.conv_general_dilated(y, params["w2"].reshape(1, 1, C, C),
                                 (1, 1), "VALID", dimension_numbers=dn_pw)
    y = jnp.maximum(bn(y, params["s2"], params["b2"]), 0.0)

    y_nchw = jnp.transpose(y, (0, 3, 1, 2))
    out = jnp.concatenate([x1, y_nchw], axis=1)
    # channel_shuffle(out, groups=2)
    out = out.reshape(B, 2, C, H, W).transpose(0, 2, 1, 3, 4).reshape(B, 2 * C, H, W)
    return out


# ------------------------- deterministic parameters ------------------------
def _folded_bn(key, C, eps=1e-5):
    k1, k2, k3, k4 = jax.random.split(key, 4)
    gamma = 1.0 + 0.1 * jax.random.normal(k1, (C,), jnp.float32)
    beta = 0.1 * jax.random.normal(k2, (C,), jnp.float32)
    mean = 0.1 * jax.random.normal(k3, (C,), jnp.float32)
    var = 1.0 + 0.1 * jax.random.uniform(k4, (C,), jnp.float32)
    scale = gamma / jnp.sqrt(var + eps)
    bias = beta - mean * scale
    return scale.reshape(1, C), bias.reshape(1, C)


def make_params(key, C):
    keys = jax.random.split(key, 6)
    s1, b1 = _folded_bn(keys[0], C)
    sd, bd = _folded_bn(keys[1], C)
    s2, b2 = _folded_bn(keys[2], C)
    return {
        "w1": 0.5 * jax.random.normal(keys[3], (C, C), jnp.float32),   # (in, out)
        "wd": 0.5 * jax.random.normal(keys[4], (3, 3, C), jnp.float32),
        "w2": 0.5 * jax.random.normal(keys[5], (C, C), jnp.float32),   # (in, out)
        "s1": s1, "b1": b1, "sd": sd, "bd": bd, "s2": s2, "b2": b2,
    }


if __name__ == "__main__":
    key = jax.random.PRNGKey(0)
    kx, kp = jax.random.split(key)

    # ShuffleV2Block(inp=4, oup=4, stride=1): branch_features = 2
    B, Cin, H, W = 2, 4, 16, 16
    x = jax.random.normal(kx, (B, Cin, H, W), jnp.float32)
    params = make_params(kp, Cin // 2)

    ref = jax.block_until_ready(reference_shuffle_v2_block(x, params))

    # Exact f32 MXU path (same semantics as the PyTorch module in eval mode).
    out_f32 = jax.block_until_ready(
        shuffle_v2_block_stride1(x, params, matmul_dtype=jnp.float32))
    assert out_f32.shape == (B, Cin, H, W), out_f32.shape
    np.testing.assert_allclose(np.asarray(out_f32), np.asarray(ref),
                               rtol=1e-4, atol=1e-4)

    # Default bf16 MXU path (operands bf16, f32 accumulation / element-wise).
    out_bf16 = jax.block_until_ready(shuffle_v2_block_stride1(x, params))
    np.testing.assert_allclose(np.asarray(out_bf16), np.asarray(ref),
                               rtol=1e-1, atol=2.5e-1)

    print("KERNEL_OK")
</pallas_src>

<mosaic_0001>
module attributes {stable_mosaic.version = 11 : i64} {
  func.func @_shuffle_v2_block_kernel(%arg0: i32, %arg1: memref<1x16x16x2xf32, #tpu.memory_space<vmem>>, %arg2: memref<2x2xf32, #tpu.memory_space<vmem>>, %arg3: memref<1x2xf32, #tpu.memory_space<vmem>>, %arg4: memref<3x3x2xf32, #tpu.memory_space<vmem>>, %arg5: memref<2x2xf32, #tpu.memory_space<vmem>>, %arg6: memref<1x2xf32, #tpu.memory_space<vmem>>, %arg7: memref<1x16x16x2xf32, #tpu.memory_space<vmem>>, %arg8: memref<1x18x18x2xf32, #tpu.memory_space<vmem>>) attributes {dimension_semantics = [#tpu.dimension_semantics<parallel>], iteration_bounds = array<i64: 2>, scalar_prefetch = 0 : i64, scratch_operands = 1 : i64, tpu.core_type = #tpu.core_type<tc>, window_params = [{transform_indices = @transform_0, window_bounds = array<i64: 1, 16, 16, 2>}, {pipeline_mode = #tpu.pipeline_mode<synchronous>, transform_indices = @transform_1, window_bounds = array<i64: 2, 2>}, {pipeline_mode = #tpu.pipeline_mode<synchronous>, transform_indices = @transform_2, window_bounds = array<i64: 1, 2>}, {pipeline_mode = #tpu.pipeline_mode<synchronous>, transform_indices = @transform_3, window_bounds = array<i64: 3, 3, 2>}, {pipeline_mode = #tpu.pipeline_mode<synchronous>, transform_indices = @transform_4, window_bounds = array<i64: 2, 2>}, {pipeline_mode = #tpu.pipeline_mode<synchronous>, transform_indices = @transform_5, window_bounds = array<i64: 1, 2>}, {transform_indices = @transform_6, window_bounds = array<i64: 1, 16, 16, 2>}]} {
    %c0 = arith.constant 0 : index
    %c0_0 = arith.constant 0 : index
    %c0_1 = arith.constant 0 : index
    %c0_2 = arith.constant 0 : index
    %0 = vector.load %arg1[%c0, %c0_0, %c0_1, %c0_2] : memref<1x16x16x2xf32, #tpu.memory_space<vmem>>, vector<1x16x16x2xf32>
    %1 = vector.shape_cast %0 : vector<1x16x16x2xf32> to vector<256x2xf32>
    %c0_3 = arith.constant 0 : index
    %c0_4 = arith.constant 0 : index
    %2 = vector.load %arg2[%c0_3, %c0_4] : memref<2x2xf32, #tpu.memory_space<vmem>>, vector<2x2xf32>
    %cst = arith.constant dense<0.000000e+00> : vector<256x2xf32>
    %3 = tpu.matmul %1, %2, %cst {dimension_numbers = #tpu.dot_dimension_numbers<[1], [0], [0], [1], [0, 0, 1, 1], [], []>} : vector<256x2xf32>, vector<2x2xf32>, vector<256x2xf32> -> vector<256x2xf32>
    %c0_5 = arith.constant 0 : index
    %c0_6 = arith.constant 0 : index
    %4 = vector.load %arg3[%c0_5, %c0_6] : memref<1x2xf32, #tpu.memory_space<vmem>>, vector<1x2xf32>
    %5 = vector.broadcast %4 : vector<1x2xf32> to vector<256x2xf32>
    %6 = arith.addf %3, %5 : vector<256x2xf32>
    %cst_7 = arith.constant 0.000000e+00 : f32
    %7 = vector.broadcast %cst_7 : f32 to vector<256x2xf32>
    %8 = arith.maximumf %6, %7 : vector<256x2xf32>
    %9 = vector.shape_cast %8 : vector<256x2xf32> to vector<1x16x16x2xf32>
    %cst_8 = arith.constant 0.000000e+00 : f32
    %10 = vector.broadcast %cst_8 : f32 to vector<1x1x18x2xf32>
    %c0_9 = arith.constant 0 : index
    %c0_10 = arith.constant 0 : index
    %c0_11 = arith.constant 0 : index
    %c0_12 = arith.constant 0 : index
    %11 = vector.load %arg8[%c0_9, %c0_10, %c0_11, %c0_12] : memref<1x18x18x2xf32, #tpu.memory_space<vmem>>, vector<1x1x18x2xf32>
    tpu.vector_store %arg8[%c0_9, %c0_10, %c0_11, %c0_12], %10 {strides = array<i32>} : memref<1x18x18x2xf32, #tpu.memory_space<vmem>>, vector<1x1x18x2xf32>,
    %cst_13 = arith.constant 0.000000e+00 : f32
    %12 = vector.broadcast %cst_13 : f32 to vector<1x1x18x2xf32>
    %c0_14 = arith.constant 0 : index
    %c17 = arith.constant 17 : index
    %c0_15 = arith.constant 0 : index
    %c0_16 = arith.constant 0 : index
    %13 = vector.load %arg8[%c0_14, %c17, %c0_15, %c0_16] : memref<1x18x18x2xf32, #tpu.memory_space<vmem>>, vector<1x1x18x2xf32>
    tpu.vector_store %arg8[%c0_14, %c17, %c0_15, %c0_16], %12 {strides = array<i32>} : memref<1x18x18x2xf32, #tpu.memory_space<vmem>>, vector<1x1x18x2xf32>,
    %cst_17 = arith.constant 0.000000e+00 : f32
    %14 = vector.broadcast %cst_17 : f32 to vector<1x18x1x2xf32>
    %c0_18 = arith.constant 0 : index
    %c0_19 = arith.constant 0 : index
    %c0_20 = arith.constant 0 : index
    %c0_21 = arith.constant 0 : index
    %15 = vector.load %arg8[%c0_18, %c0_19, %c0_20, %c0_21] : memref<1x18x18x2xf32, #tpu.memory_space<vmem>>, vector<1x18x1x2xf32>
    tpu.vector_store %arg8[%c0_18, %c0_19, %c0_20, %c0_21], %14 {strides = array<i32>} : memref<1x18x18x2xf32, #tpu.memory_space<vmem>>, vector<1x18x1x2xf32>,
    %cst_22 = arith.constant 0.000000e+00 : f32
    %16 = vector.broadcast %cst_22 : f32 to vector<1x18x1x2xf32>
    %c0_23 = arith.constant 0 : index
    %c0_24 = arith.constant 0 : index
    %c17_25 = arith.constant 17 : index
    %c0_26 = arith.constant 0 : index
    %17 = vector.load %arg8[%c0_23, %c0_24, %c17_25, %c0_26] : memref<1x18x18x2xf32, #tpu.memory_space<vmem>>, vector<1x18x1x2xf32>
    tpu.vector_store %arg8[%c0_23, %c0_24, %c17_25, %c0_26], %16 {strides = array<i32>} : memref<1x18x18x2xf32, #tpu.memory_space<vmem>>, vector<1x18x1x2xf32>,
    %c0_27 = arith.constant 0 : index
    %c1 = arith.constant 1 : index
    %c1_28 = arith.constant 1 : index
    %c0_29 = arith.constant 0 : index
    %18 = vector.load %arg8[%c0_27, %c1, %c1_28, %c0_29] : memref<1x18x18x2xf32, #tpu.memory_space<vmem>>, vector<1x16x16x2xf32>
    tpu.vector_store %arg8[%c0_27, %c1, %c1_28, %c0_29], %9 {strides = array<i32>} : memref<1x18x18x2xf32, #tpu.memory_space<vmem>>, vector<1x16x16x2xf32>,
    %c0_30 = arith.constant 0 : index
    %c0_31 = arith.constant 0 : index
    %c0_32 = arith.constant 0 : index
    %c0_33 = arith.constant 0 : index
    %19 = vector.load %arg8[%c0_30, %c0_31, %c0_32, %c0_33] : memref<1x18x18x2xf32, #tpu.memory_space<vmem>>, vector<1x18x18x2xf32>
    %c0_34 = arith.constant 0 : index
    %c0_35 = arith.constant 0 : index
    %c0_36 = arith.constant 0 : index
    %20 = vector.load %arg4[%c0_34, %c0_35, %c0_36] : memref<3x3x2xf32, #tpu.memory_space<vmem>>, vector<3x3x2xf32>
    %21 = vector.extract_strided_slice %19 {offsets = [0, 0, 0, 0], sizes = [1, 16, 16, 2], strides = [1, 1, 1, 1]} : vector<1x18x18x2xf32> to vector<1x16x16x2xf32>
    %22 = vector.extract_strided_slice %20 {offsets = [0, 0, 0], sizes = [1, 1, 2], strides = [1, 1, 1]} : vector<3x3x2xf32> to vector<1x1x2xf32>
    %23 = vector.shape_cast %22 : vector<1x1x2xf32> to vector<2xf32>
    %24 = vector.shape_cast %23 : vector<2xf32> to vector<1x1x1x2xf32>
    %25 = vector.broadcast %24 : vector<1x1x1x2xf32> to vector<1x16x16x2xf32>
    %26 = arith.mulf %21, %25 : vector<1x16x16x2xf32>
    %27 = vector.extract_strided_slice %19 {offsets = [0, 0, 1, 0], sizes = [1, 16, 16, 2], strides = [1, 1, 1, 1]} : vector<1x18x18x2xf32> to vector<1x16x16x2xf32>
    %28 = vector.extract_strided_slice %20 {offsets = [0, 1, 0], sizes = [1, 1, 2], strides = [1, 1, 1]} : vector<3x3x2xf32> to vector<1x1x2xf32>
    %29 = vector.shape_cast %28 : vector<1x1x2xf32> to vector<2xf32>
    %30 = vector.shape_cast %29 : vector<2xf32> to vector<1x1x1x2xf32>
    %31 = vector.broadcast %30 : vector<1x1x1x2xf32> to vector<1x16x16x2xf32>
    %32 = arith.mulf %27, %31 : vector<1x16x16x2xf32>
    %33 = arith.addf %26, %32 : vector<1x16x16x2xf32>
    %34 = vector.extract_strided_slice %19 {offsets = [0, 0, 2, 0], sizes = [1, 16, 16, 2], strides = [1, 1, 1, 1]} : vector<1x18x18x2xf32> to vector<1x16x16x2xf32>
    %35 = vector.extract_strided_slice %20 {offsets = [0, 2, 0], sizes = [1, 1, 2], strides = [1, 1, 1]} : vector<3x3x2xf32> to vector<1x1x2xf32>
    %36 = vector.shape_cast %35 : vector<1x1x2xf32> to vector<2xf32>
    %37 = vector.shape_cast %36 : vector<2xf32> to vector<1x1x1x2xf32>
    %38 = vector.broadcast %37 : vector<1x1x1x2xf32> to vector<1x16x16x2xf32>
    %39 = arith.mulf %34, %38 : vector<1x16x16x2xf32>
    %40 = arith.addf %33, %39 : vector<1x16x16x2xf32>
    %41 = vector.extract_strided_slice %19 {offsets = [0, 1, 0, 0], sizes = [1, 16, 16, 2], strides = [1, 1, 1, 1]} : vector<1x18x18x2xf32> to vector<1x16x16x2xf32>
    %42 = vector.extract_strided_slice %20 {offsets = [1, 0, 0], sizes = [1, 1, 2], strides = [1, 1, 1]} : vector<3x3x2xf32> to vector<1x1x2xf32>
    %43 = vector.shape_cast %42 : vector<1x1x2xf32> to vector<2xf32>
    %44 = vector.shape_cast %43 : vector<2xf32> to vector<1x1x1x2xf32>
    %45 = vector.broadcast %44 : vector<1x1x1x2xf32> to vector<1x16x16x2xf32>
    %46 = arith.mulf %41, %45 : vector<1x16x16x2xf32>
    %47 = arith.addf %40, %46 : vector<1x16x16x2xf32>
    %48 = vector.extract_strided_slice %19 {offsets = [0, 1, 1, 0], sizes = [1, 16, 16, 2], strides = [1, 1, 1, 1]} : vector<1x18x18x2xf32> to vector<1x16x16x2xf32>
    %49 = vector.extract_strided_slice %20 {offsets = [1, 1, 0], sizes = [1, 1, 2], strides = [1, 1, 1]} : vector<3x3x2xf32> to vector<1x1x2xf32>
    %50 = vector.shape_cast %49 : vector<1x1x2xf32> to vector<2xf32>
    %51 = vector.shape_cast %50 : vector<2xf32> to vector<1x1x1x2xf32>
    %52 = vector.broadcast %51 : vector<1x1x1x2xf32> to vector<1x16x16x2xf32>
    %53 = arith.mulf %48, %52 : vector<1x16x16x2xf32>
    %54 = arith.addf %47, %53 : vector<1x16x16x2xf32>
    %55 = vector.extract_strided_slice %19 {offsets = [0, 1, 2, 0], sizes = [1, 16, 16, 2], strides = [1, 1, 1, 1]} : vector<1x18x18x2xf32> to vector<1x16x16x2xf32>
    %56 = vector.extract_strided_slice %20 {offsets = [1, 2, 0], sizes = [1, 1, 2], strides = [1, 1, 1]} : vector<3x3x2xf32> to vector<1x1x2xf32>
    %57 = vector.shape_cast %56 : vector<1x1x2xf32> to vector<2xf32>
    %58 = vector.shape_cast %57 : vector<2xf32> to vector<1x1x1x2xf32>
    %59 = vector.broadcast %58 : vector<1x1x1x2xf32> to vector<1x16x16x2xf32>
    %60 = arith.mulf %55, %59 : vector<1x16x16x2xf32>
    %61 = arith.addf %54, %60 : vector<1x16x16x2xf32>
    %62 = vector.extract_strided_slice %19 {offsets = [0, 2, 0, 0], sizes = [1, 16, 16, 2], strides = [1, 1, 1, 1]} : vector<1x18x18x2xf32> to vector<1x16x16x2xf32>
    %63 = vector.extract_strided_slice %20 {offsets = [2, 0, 0], sizes = [1, 1, 2], strides = [1, 1, 1]} : vector<3x3x2xf32> to vector<1x1x2xf32>
    %64 = vector.shape_cast %63 : vector<1x1x2xf32> to vector<2xf32>
    %65 = vector.shape_cast %64 : vector<2xf32> to vector<1x1x1x2xf32>
    %66 = vector.broadcast %65 : vector<1x1x1x2xf32> to vector<1x16x16x2xf32>
    %67 = arith.mulf %62, %66 : vector<1x16x16x2xf32>
    %68 = arith.addf %61, %67 : vector<1x16x16x2xf32>
    %69 = vector.extract_strided_slice %19 {offsets = [0, 2, 1, 0], sizes = [1, 16, 16, 2], strides = [1, 1, 1, 1]} : vector<1x18x18x2xf32> to vector<1x16x16x2xf32>
    %70 = vector.extract_strided_slice %20 {offsets = [2, 1, 0], sizes = [1, 1, 2], strides = [1, 1, 1]} : vector<3x3x2xf32> to vector<1x1x2xf32>
    %71 = vector.shape_cast %70 : vector<1x1x2xf32> to vector<2xf32>
    %72 = vector.shape_cast %71 : vector<2xf32> to vector<1x1x1x2xf32>
    %73 = vector.broadcast %72 : vector<1x1x1x2xf32> to vector<1x16x16x2xf32>
    %74 = arith.mulf %69, %73 : vector<1x16x16x2xf32>
    %75 = arith.addf %68, %74 : vector<1x16x16x2xf32>
    %76 = vector.extract_strided_slice %19 {offsets = [0, 2, 2, 0], sizes = [1, 16, 16, 2], strides = [1, 1, 1, 1]} : vector<1x18x18x2xf32> to vector<1x16x16x2xf32>
    %77 = vector.extract_strided_slice %20 {offsets = [2, 2, 0], sizes = [1, 1, 2], strides = [1, 1, 1]} : vector<3x3x2xf32> to vector<1x1x2xf32>
    %78 = vector.shape_cast %77 : vector<1x1x2xf32> to vector<2xf32>
    %79 = vector.shape_cast %78 : vector<2xf32> to vector<1x1x1x2xf32>
    %80 = vector.broadcast %79 : vector<1x1x1x2xf32> to vector<1x16x16x2xf32>
    %81 = arith.mulf %76, %80 : vector<1x16x16x2xf32>
    %82 = arith.addf %75, %81 : vector<1x16x16x2xf32>
    %83 = vector.shape_cast %82 : vector<1x16x16x2xf32> to vector<256x2xf32>
    %c0_37 = arith.constant 0 : index
    %c0_38 = arith.constant 0 : index
    %84 = vector.load %arg5[%c0_37, %c0_38] : memref<2x2xf32, #tpu.memory_space<vmem>>, vector<2x2xf32>
    %cst_39 = arith.constant dense<0.000000e+00> : vector<256x2xf32>
    %85 = tpu.matmul %83, %84, %cst_39 {dimension_numbers = #tpu.dot_dimension_numbers<[1], [0], [0], [1], [0, 0, 1, 1], [], []>} : vector<256x2xf32>, vector<2x2xf32>, vector<256x2xf32> -> vector<256x2xf32>
    %c0_40 = arith.constant 0 : index
    %c0_41 = arith.constant 0 : index
    %86 = vector.load %arg6[%c0_40, %c0_41] : memref<1x2xf32, #tpu.memory_space<vmem>>, vector<1x2xf32>
    %87 = vector.broadcast %86 : vector<1x2xf32> to vector<256x2xf32>
    %88 = arith.addf %85, %87 : vector<256x2xf32>
    %cst_42 = arith.constant 0.000000e+00 : f32
    %89 = vector.broadcast %cst_42 : f32 to vector<256x2xf32>
    %90 = arith.maximumf %88, %89 : vector<256x2xf32>
    %91 = vector.shape_cast %90 : vector<256x2xf32> to vector<1x16x16x2xf32>
    %c0_43 = arith.constant 0 : index
    %c0_44 = arith.constant 0 : index
    %c0_45 = arith.constant 0 : index
    %c0_46 = arith.constant 0 : index
    %92 = vector.load %arg7[%c0_43, %c0_44, %c0_45, %c0_46] : memref<1x16x16x2xf32, #tpu.memory_space<vmem>>, vector<1x16x16x2xf32>
    tpu.vector_store %arg7[%c0_43, %c0_44, %c0_45, %c0_46], %91 {strides = array<i32>} : memref<1x16x16x2xf32, #tpu.memory_space<vmem>>, vector<1x16x16x2xf32>,
    return
  }
  func.func @transform_0(%arg0: i32) -> (i32, i32, i32, i32) {
    %c0_i32 = arith.constant 0 : i32
    %c0_i32_0 = arith.constant 0 : i32
    %c0_i32_1 = arith.constant 0 : i32
    %c0_i32_2 = arith.constant 0 : i32
    return %arg0, %c0_i32, %c0_i32_0, %c0_i32_1 : i32, i32, i32, i32
  }
  func.func @transform_1(%arg0: i32) -> (i32, i32) {
    %c0_i32 = arith.constant 0 : i32
    %c0_i32_0 = arith.constant 0 : i32
    %c0_i32_1 = arith.constant 0 : i32
    return %c0_i32, %c0_i32_0 : i32, i32
  }
  func.func @transform_2(%arg0: i32) -> (i32, i32) {
    %c0_i32 = arith.constant 0 : i32
    %c0_i32_0 = arith.constant 0 : i32
    %c0_i32_1 = arith.constant 0 : i32
    return %c0_i32, %c0_i32_0 : i32, i32
  }
  func.func @transform_3(%arg0: i32) -> (i32, i32, i32) {
    %c0_i32 = arith.constant 0 : i32
    %c0_i32_0 = arith.constant 0 : i32
    %c0_i32_1 = arith.constant 0 : i32
    %c0_i32_2 = arith.constant 0 : i32
    return %c0_i32, %c0_i32_0, %c0_i32_1 : i32, i32, i32
  }
  func.func @transform_4(%arg0: i32) -> (i32, i32) {
    %c0_i32 = arith.constant 0 : i32
    %c0_i32_0 = arith.constant 0 : i32
    %c0_i32_1 = arith.constant 0 : i32
    return %c0_i32, %c0_i32_0 : i32, i32
  }
  func.func @transform_5(%arg0: i32) -> (i32, i32) {
    %c0_i32 = arith.constant 0 : i32
    %c0_i32_0 = arith.constant 0 : i32
    %c0_i32_1 = arith.constant 0 : i32
    return %c0_i32, %c0_i32_0 : i32, i32
  }
  func.func @transform_6(%arg0: i32) -> (i32, i32, i32, i32) {
    %c0_i32 = arith.constant 0 : i32
    %c0_i32_0 = arith.constant 0 : i32
    %c0_i32_1 = arith.constant 0 : i32
    %c0_i32_2 = arith.constant 0 : i32
    return %arg0, %c0_i32, %c0_i32_0, %c0_i32_1 : i32, i32, i32, i32
  }
}

</mosaic_0001>

<llo_original>
// kernel: tpu_custom_call.1
$region0: #{tpu_custom_call.1}
  #allocation0 [shape = 'u32[]', space=smem, size = 0x4, offset = 0x4, fixed_abs, tag = 'smem constant byte address 0x4 - core index']
  #allocation1 [shape = 'u32[144,128]{1,0:T(1,128)}', space=vmem, size = 0x12000, scoped, tag = 'internal scratch']
  #allocation2 [shape = 'f32[1,18,18,2]{3,2,1,0:T(8,128)}', space=vmem, size = 0x36000, scoped, tag = 'scratch operand']
  %s0 = inlined_call_operand.vmem [shape: f32[2,16,16,2], index: 0, kind: input, shape index: {}]
  %s1 = inlined_call_operand.vmem [shape: f32[2,2], index: 1, kind: input, shape index: {}]
  %s2 = inlined_call_operand.vmem [shape: f32[1,2], index: 2, kind: input, shape index: {}]
  %s3 = inlined_call_operand.vmem [shape: f32[3,3,2], index: 3, kind: input, shape index: {}]
  %s4 = inlined_call_operand.vmem [shape: f32[2,2], index: 4, kind: input, shape index: {}]
  %s5 = inlined_call_operand.vmem [shape: f32[1,2], index: 5, kind: input, shape index: {}]
  %s6 = inlined_call_operand.vmem [shape: f32[2,16,16,2], index: 6, kind: output, shape index: {}]
  %s7 = sld [smem:[#allocation0]]
  $region57: #{tpu_custom_call.1} parent=0
    _
  %s9 = ssub.s32 1, %s7
  %s10 = scalar_select 0, %s9, %s7
  loop: start=0, step=1, limit=4
  $region2: #{tpu_custom_call.1} parent=0 // loop_pre_header
    _
  $region3: #{tpu_custom_call.1} parent=0 // loop_header
    %s12 = sphi 0, %s16
    %p13 = scmp.ge.s32.totalorder %s12, 4
    %s22 = sphi 0, %s24
    %s25 = sphi 0, %s22
    %s26 = sphi 0, %s25
    %s42 = sphi 0, %s26
    %s46 = sphi 0, %s46
    %s48 = sphi 0, %s46
    %s49 = sphi 0, %s48
    %s63 = sphi 0, %s49
    %s67 = sphi 0, %s67
    %s69 = sphi 0, %s67
    %s70 = sphi 0, %s69
    %s84 = sphi 0, %s70
    %s88 = sphi 0, %s88
    %s90 = sphi 0, %s88
    %s91 = sphi 0, %s90
    %s105 = sphi 0, %s91
    %s109 = sphi 0, %s109
    %s111 = sphi 0, %s109
    %s112 = sphi 0, %s111
    %s126 = sphi 0, %s112
    %s130 = sphi 0, %s130
    %s132 = sphi 0, %s130
    %s133 = sphi 0, %s132
    %s147 = sphi 0, %s133
    %s153 = sphi 0, %s155
    %s156 = sphi 0, %s153
    %s157 = sphi 0, %s156
    %s173 = sphi 0, %s157
  $region4: #{tpu_custom_call.1} parent=0 // loop_header_branch
    %15 = sbr.rel (%p13) target = $region8
  $region5: #{tpu_custom_call.1} parent=0 // loop_body
    %s17 = ssub.s32 %s12, 1
    %s18 = ssub.s32 %s12, 2
    %s19 = sadd.s32 %s12, 1
    %s20 = ssub.s32 %s12, %s19
    %p21 = scmp.eq.s32.totalorder %s20, 0
    %s23 = sadd.s32 %s22, 1
    %s24 = scalar_select %p21, %s22, %s23
    %p27 = pneg %p21
    %p28 = scmp.eq.s32.totalorder %s12, 1
    %p29 = por %p27, %p28
    %p30 = scmp.ne.s32.totalorder %s22, %s25
    %p31 = scmp.eq.s32.totalorder %s12, 0
    %p32 = por %p30, %p31
    %p33 = scmp.ne.s32.totalorder %s22, %s25
    %p34 = scmp.eq.s32.totalorder %s17, 1
    %p35 = por %p33, %p34
    %p36 = scmp.ne.s32.totalorder %s25, %s26
    %p37 = scmp.eq.s32.totalorder %s17, 0
    %p38 = por %p36, %p37
    %p39 = scmp.ne.s32.totalorder %s25, %s26
    %p40 = scmp.eq.s32.totalorder %s18, 1
    %p41 = por %p39, %p40
    %p43 = scmp.ne.s32.totalorder %s26, %s42
    %p44 = scmp.eq.s32.totalorder %s18, 0
    %p45 = por %p43, %p44
    %s47 = sadd.s32 %s46, 1
    %p50 = scmp.eq.s32.totalorder %s12, 1
    %p51 = scmp.ne.s32.totalorder %s46, %s48
    %p52 = scmp.eq.s32.totalorder %s12, 0
    %p53 = por %p51, %p52
    %p54 = scmp.ne.s32.totalorder %s46, %s48
    %p55 = scmp.eq.s32.totalorder %s17, 1
    %p56 = por %p54, %p55
    %p57 = scmp.ne.s32.totalorder %s48, %s49
    %p58 = scmp.eq.s32.totalorder %s17, 0
    %p59 = por %p57, %p58
    %p60 = scmp.ne.s32.totalorder %s48, %s49
    %p61 = scmp.eq.s32.totalorder %s18, 1
    %p62 = por %p60, %p61
    %p64 = scmp.ne.s32.totalorder %s49, %s63
    %p65 = scmp.eq.s32.totalorder %s18, 0
    %p66 = por %p64, %p65
    %s68 = sadd.s32 %s67, 1
    %p71 = scmp.eq.s32.totalorder %s12, 1
    %p72 = scmp.ne.s32.totalorder %s67, %s69
    %p73 = scmp.eq.s32.totalorder %s12, 0
    %p74 = por %p72, %p73
    %p75 = scmp.ne.s32.totalorder %s67, %s69
    %p76 = scmp.eq.s32.totalorder %s17, 1
    %p77 = por %p75, %p76
    %p78 = scmp.ne.s32.totalorder %s69, %s70
    %p79 = scmp.eq.s32.totalorder %s17, 0
    %p80 = por %p78, %p79
    %p81 = scmp.ne.s32.totalorder %s69, %s70
    %p82 = scmp.eq.s32.totalorder %s18, 1
    %p83 = por %p81, %p82
    %p85 = scmp.ne.s32.totalorder %s70, %s84
    %p86 = scmp.eq.s32.totalorder %s18, 0
    %p87 = por %p85, %p86
    %s89 = sadd.s32 %s88, 1
    %p92 = scmp.eq.s32.totalorder %s12, 1
    %p93 = scmp.ne.s32.totalorder %s88, %s90
    %p94 = scmp.eq.s32.totalorder %s12, 0
    %p95 = por %p93, %p94
    %p96 = scmp.ne.s32.totalorder %s88, %s90
    %p97 = scmp.eq.s32.totalorder %s17, 1
    %p98 = por %p96, %p97
    %p99 = scmp.ne.s32.totalorder %s90, %s91
    %p100 = scmp.eq.s32.totalorder %s17, 0
    %p101 = por %p99, %p100
    %p102 = scmp.ne.s32.totalorder %s90, %s91
    %p103 = scmp.eq.s32.totalorder %s18, 1
    %p104 = por %p102, %p103
    %p106 = scmp.ne.s32.totalorder %s91, %s105
    %p107 = scmp.eq.s32.totalorder %s18, 0
    %p108 = por %p106, %p107
    %s110 = sadd.s32 %s109, 1
    %p113 = scmp.eq.s32.totalorder %s12, 1
    %p114 = scmp.ne.s32.totalorder %s109, %s111
    %p115 = scmp.eq.s32.totalorder %s12, 0
    %p116 = por %p114, %p115
    %p117 = scmp.ne.s32.totalorder %s109, %s111
    %p118 = scmp.eq.s32.totalorder %s17, 1
    %p119 = por %p117, %p118
    %p120 = scmp.ne.s32.totalorder %s111, %s112
    %p121 = scmp.eq.s32.totalorder %s17, 0
    %p122 = por %p120, %p121
    %p123 = scmp.ne.s32.totalorder %s111, %s112
    %p124 = scmp.eq.s32.totalorder %s18, 1
    %p125 = por %p123, %p124
    %p127 = scmp.ne.s32.totalorder %s112, %s126
    %p128 = scmp.eq.s32.totalorder %s18, 0
    %p129 = por %p127, %p128
    %s131 = sadd.s32 %s130, 1
    %p134 = scmp.eq.s32.totalorder %s12, 1
    %p135 = scmp.ne.s32.totalorder %s130, %s132
    %p136 = scmp.eq.s32.totalorder %s12, 0
    %p137 = por %p135, %p136
    %p138 = scmp.ne.s32.totalorder %s130, %s132
    %p139 = scmp.eq.s32.totalorder %s17, 1
    %p140 = por %p138, %p139
    %p141 = scmp.ne.s32.totalorder %s132, %s133
    %p142 = scmp.eq.s32.totalorder %s17, 0
    %p143 = por %p141, %p142
    %p144 = scmp.ne.s32.totalorder %s132, %s133
    %p145 = scmp.eq.s32.totalorder %s18, 1
    %p146 = por %p144, %p145
    %p148 = scmp.ne.s32.totalorder %s133, %s147
    %p149 = scmp.eq.s32.totalorder %s18, 0
    %p150 = por %p148, %p149
    %s151 = ssub.s32 %s12, %s19
    %p152 = scmp.eq.s32.totalorder %s151, 0
    %s154 = sadd.s32 %s153, 1
    %s155 = scalar_select %p152, %s153, %s154
    %p158 = pneg %p152
    %p159 = scmp.eq.s32.totalorder %s12, 1
    %p160 = por %p158, %p159
    %p161 = scmp.ne.s32.totalorder %s153, %s156
    %p162 = scmp.eq.s32.totalorder %s12, 0
    %p163 = por %p161, %p162
    %p164 = scmp.ne.s32.totalorder %s153, %s156
    %p165 = scmp.eq.s32.totalorder %s17, 1
    %p166 = por %p164, %p165
    %p167 = scmp.ne.s32.totalorder %s156, %s157
    %p168 = scmp.eq.s32.totalorder %s17, 0
    %p169 = por %p167, %p168
    %p170 = scmp.ne.s32.totalorder %s156, %s157
    %p171 = scmp.eq.s32.totalorder %s18, 1
    %p172 = por %p170, %p171
    %p174 = scmp.ne.s32.totalorder %s157, %s173
    %p175 = scmp.eq.s32.totalorder %s18, 0
    %p176 = por %p174, %p175
    %p177 = scmp.le.s32.totalorder 1, %s12
    %p178 = scmp.lt.s32.totalorder %s12, 3
    %p179 = pnand %p177, %p178
    %p180 = pneg %p179
    // Predicated region
    $region9: #{tpu_custom_call.1} parent=5 // pred_check
      _
    $region10: #{tpu_custom_call.1} parent=5 // pred_check_branch
      %182 = sbr.rel (%p179) target = $region12
    $region11: #{tpu_custom_call.1} parent=5 // pred_region
      %s183 = ssub.s32 %s12, 1
      // Predicated region
      $region13: #{tpu_custom_call.1} parent=11 // pred_check
        %p184 = pneg %p59
      $region14: #{tpu_custom_call.1} parent=11 // pred_check_branch
        %186 = sbr.rel (%p184) target = $region16
      $region15: #{tpu_custom_call.1} parent=11 // pred_region
        _
      $region16: #{tpu_custom_call.1} parent=11 // pred_fallthru
        _
      // Predicated region
      $region17: #{tpu_custom_call.1} parent=11 // pred_check
        %p187 = pneg %p80
      $region18: #{tpu_custom_call.1} parent=11 // pred_check_branch
        %189 = sbr.rel (%p187) target = $region20
      $region19: #{tpu_custom_call.1} parent=11 // pred_region
        _
      $region20: #{tpu_custom_call.1} parent=11 // pred_fallthru
        _
      // Predicated region
      $region21: #{tpu_custom_call.1} parent=11 // pred_check
        %p190 = pneg %p101
      $region22: #{tpu_custom_call.1} parent=11 // pred_check_branch
        %192 = sbr.rel (%p190) target = $region24
      $region23: #{tpu_custom_call.1} parent=11 // pred_region
        _
      $region24: #{tpu_custom_call.1} parent=11 // pred_fallthru
        _
      // Predicated region
      $region25: #{tpu_custom_call.1} parent=11 // pred_check
        %p193 = pneg %p122
      $region26: #{tpu_custom_call.1} parent=11 // pred_check_branch
        %195 = sbr.rel (%p193) target = $region28
      $region27: #{tpu_custom_call.1} parent=11 // pred_region
        _
      $region28: #{tpu_custom_call.1} parent=11 // pred_fallthru
        _
      // Predicated region
      $region29: #{tpu_custom_call.1} parent=11 // pred_check
        %p196 = pneg %p143
      $region30: #{tpu_custom_call.1} parent=11 // pred_check_branch
        %198 = sbr.rel (%p196) target = $region32
      $region31: #{tpu_custom_call.1} parent=11 // pred_region
        _
      $region32: #{tpu_custom_call.1} parent=11 // pred_fallthru
        _
    $region12: #{tpu_custom_call.1} parent=5 // pred_fallthru
      _
    %p199 = scmp.lt.s32.totalorder %s12, 2
    // Predicated region
    $region33: #{tpu_custom_call.1} parent=5 // pred_check
      %p200 = pneg %p199
    $region34: #{tpu_custom_call.1} parent=5 // pred_check_branch
      %202 = sbr.rel (%p200) target = $region36
    $region35: #{tpu_custom_call.1} parent=5 // pred_region
      // Predicated region
      $region37: #{tpu_custom_call.1} parent=35 // pred_check
        %p203 = pneg %p32
      $region38: #{tpu_custom_call.1} parent=35 // pred_check_branch
        %205 = sbr.rel (%p203) target = $region40
      $region39: #{tpu_custom_call.1} parent=35 // pred_region
        %p206 = scmp.lt.s32.totalorder %s12, 1
        %s207 = scalar_select %p206, %s12, 1
        %s208 = smul.addr %s207, 32
        %s209 = smul.addr %s208, 8
        %s210 = scalar_lea.vmem %s0, %s209
      $region40: #{tpu_custom_call.1} parent=35 // pred_fallthru
        _
    $region36: #{tpu_custom_call.1} parent=5 // pred_fallthru
      _
    %p211 = scmp.le.s32.totalorder 1, %s12
    %p212 = scmp.lt.s32.totalorder %s12, 3
    %p213 = pnand %p211, %p212
    %p214 = pneg %p213
    // Predicated region
    $region41: #{tpu_custom_call.1} parent=5 // pred_check
      _
    $region42: #{tpu_custom_call.1} parent=5 // pred_check_branch
      %216 = sbr.rel (%p213) target = $region44
    $region43: #{tpu_custom_call.1} parent=5 // pred_region
      %s217 = ssub.s32 %s12, 1
      %p218 = scmp.lt.s32.totalorder %s17, 1
      %s219 = scalar_select %p218, %s17, 1
      %s220 = smul.addr %s219, 32
      %s221 = smul.addr %s220, 8
      %s222 = scalar_lea.vmem %s0, %s221
      %p223 = pneg %p38
      %p224 = pneg %p35
      %p225 = pneg %p59
      %p226 = pneg %p56
      %p227 = pneg %p80
      %p228 = pneg %p77
      %p229 = pneg %p101
      %p230 = pneg %p98
      %p231 = pneg %p122
      %p232 = pneg %p119
      %p233 = pneg %p143
      %p234 = pneg %p140
      %p235 = pneg %p169
      %p236 = pneg %p166
      %p237 = scmp.lt.s32.totalorder %s17, 1
      %s238 = scalar_select %p237, %s17, 1
      %s239 = smul.addr %s238, 32
      %s240 = smul.addr %s239, 8
      %s241 = scalar_lea.vmem %s6, %s240
      %p242 = scmp.lt.s32.totalorder %s17, 1
      %s243 = scalar_select %p242, %s17, 1
      %s244 = smul.addr %s243, 32
      %s245 = smul.addr %s244, 8
      %s246 = scalar_lea.vmem %s0, %s245
      %p247 = scmp.lt.s32.totalorder %s17, 1
      %s248 = scalar_select %p247, %s17, 1
      %s249 = smul.addr %s248, 32
      %s250 = smul.addr %s249, 8
      %s251 = scalar_lea.vmem %s6, %s250
      %v252 = vld [vmem:[%s246] sm:$0xff]
      %v253 = vld [vmem:[%s246 + $0x8] sm:$0xff]
      %v254 = vld [vmem:[%s246 + $0x10] sm:$0xff]
      %v255 = vld [vmem:[%s246 + $0x18] sm:$0xff]
      %v256 = vld [vmem:[%s246 + $0x20] sm:$0xff]
      %v257 = vld [vmem:[%s246 + $0x28] sm:$0xff]
      %v258 = vld [vmem:[%s246 + $0x30] sm:$0xff]
      %v259 = vld [vmem:[%s246 + $0x38] sm:$0xff]
      %v260 = vld [vmem:[%s246 + $0x40] sm:$0xff]
      %v261 = vld [vmem:[%s246 + $0x48] sm:$0xff]
      %v262 = vld [vmem:[%s246 + $0x50] sm:$0xff]
      %v263 = vld [vmem:[%s246 + $0x58] sm:$0xff]
      %v264 = vld [vmem:[%s246 + $0x60] sm:$0xff]
      %v265 = vld [vmem:[%s246 + $0x68] sm:$0xff]
      %v266 = vld [vmem:[%s246 + $0x70] sm:$0xff]
      %v267 = vld [vmem:[%s246 + $0x78] sm:$0xff]
      %v268 = vld [vmem:[%s246 + $0x80] sm:$0xff]
      %v269 = vld [vmem:[%s246 + $0x88] sm:$0xff]
      %v270 = vld [vmem:[%s246 + $0x90] sm:$0xff]
      %v271 = vld [vmem:[%s246 + $0x98] sm:$0xff]
      %v272 = vld [vmem:[%s246 + $0xa0] sm:$0xff]
      %v273 = vld [vmem:[%s246 + $0xa8] sm:$0xff]
      %v274 = vld [vmem:[%s246 + $0xb0] sm:$0xff]
      %v275 = vld [vmem:[%s246 + $0xb8] sm:$0xff]
      %v276 = vld [vmem:[%s246 + $0xc0] sm:$0xff]
      %v277 = vld [vmem:[%s246 + $0xc8] sm:$0xff]
      %v278 = vld [vmem:[%s246 + $0xd0] sm:$0xff]
      %v279 = vld [vmem:[%s246 + $0xd8] sm:$0xff]
      %v280 = vld [vmem:[%s246 + $0xe0] sm:$0xff]
      %v281 = vld [vmem:[%s246 + $0xe8] sm:$0xff]
      %v282 = vld [vmem:[%s246 + $0xf0] sm:$0xff]
      %v283 = vld [vmem:[%s246 + $0xf8] sm:$0xff]
      %v284 = vld [vmem:[%s1] sm:$0x3]
      %v285 = vld [vmem:[%s2] sm:$0x1]
      %v287 = vlaneseq
      %v288 = vshrl.u32 %v287, 7
      %v289 = vsub.s32 0, %v288
      %v290 = vrot.slane %v285, %v289
      %vm292 = vcmask 15360
      %v294 = vsel %vm292, %v252, 0
      %v297 = vsel %vm292, %v253, 0
      %v300 = vsel %vm292, %v254, 0
      %v303 = vsel %vm292, %v255, 0
      %v306 = vsel %vm292, %v256, 0
      %v309 = vsel %vm292, %v257, 0
      %v312 = vsel %vm292, %v258, 0
      %v315 = vsel %vm292, %v259, 0
      %v318 = vsel %vm292, %v260, 0
      %v321 = vsel %vm292, %v261, 0
      %v324 = vsel %vm292, %v262, 0
      %v327 = vsel %vm292, %v263, 0
      %v330 = vsel %vm292, %v264, 0
      %v333 = vsel %vm292, %v265, 0
      %v336 = vsel %vm292, %v266, 0
      %v339 = vsel %vm292, %v267, 0
      %v342 = vsel %vm292, %v268, 0
      %v345 = vsel %vm292, %v269, 0
      %v348 = vsel %vm292, %v270, 0
      %v351 = vsel %vm292, %v271, 0
      %v354 = vsel %vm292, %v272, 0
      %v357 = vsel %vm292, %v273, 0
      %v360 = vsel %vm292, %v274, 0
      %v363 = vsel %vm292, %v275, 0
      %v366 = vsel %vm292, %v276, 0
      %v369 = vsel %vm292, %v277, 0
      %v372 = vsel %vm292, %v278, 0
      %v375 = vsel %vm292, %v279, 0
      %v378 = vsel %vm292, %v280, 0
      %v381 = vsel %vm292, %v281, 0
      %v384 = vsel %vm292, %v282, 0
      %v387 = vsel %vm292, %v283, 0
      %vm389 = vcmask 1041408
      %v391 = vsel %vm389, %v284, 0
      %393 = vmatprep.subr.mxu0 0.0
      %394 = vmatpush1.msra.mxu0 %v391
      %395 = vmatprep.subr.mxu0 0.0
      %396 = vmatpush1.msra.mxu0 0.0
      %397 = vmatprep.subr.mxu0 0.0
      %398 = vmatpush1.msra.mxu0 0.0
      %399 = vmatprep.subr.mxu0 0.0
      %400 = vmatpush1.msra.mxu0 0.0
      %401 = vmatprep.subr.mxu0 0.0
      %402 = vmatpush1.msra.mxu0 0.0
      %403 = vmatprep.subr.mxu0 0.0
      %404 = vmatpush1.msra.mxu0 0.0
      %405 = vmatprep.subr.mxu0 0.0
      %406 = vmatpush1.msra.mxu0 0.0
      %407 = vmatprep.subr.mxu0 0.0
      %408 = vmatpush1.msra.mxu0 0.0
      %409 = vmatprep.subr.mxu0 0.0
      %410 = vmatpush1.msra.mxu0 0.0
      %411 = vmatprep.subr.mxu0 0.0
      %412 = vmatpush1.msra.mxu0 0.0
      %413 = vmatprep.subr.mxu0 0.0
      %414 = vmatpush1.msra.mxu0 0.0
      %415 = vmatprep.subr.mxu0 0.0
      %416 = vmatpush1.msra.mxu0 0.0
      %417 = vmatprep.subr.mxu0 0.0
      %418 = vmatpush1.msra.mxu0 0.0
      %419 = vmatprep.subr.mxu0 0.0
      %420 = vmatpush1.msra.mxu0 0.0
      %421 = vmatprep.subr.mxu0 0.0
      %422 = vmatpush1.msra.mxu0 0.0
      %423 = vmatprep.subr.mxu0 0.0
      %424 = vmatpush1.msra.mxu0 0.0
      %425 = vmatprep.subr.mxu0 0.0
      %426 = vmatpush1.msra.mxu0 0.0
      %427 = vmatprep.subr.mxu0 0.0
      %428 = vmatpush1.msra.mxu0 0.0
      %429 = vmatprep.subr.mxu0 0.0
      %430 = vmatpush1.msra.mxu0 0.0
      %431 = vmatprep.subr.mxu0 0.0
      %432 = vmatpush1.msra.mxu0 0.0
      %433 = vmatprep.subr.mxu0 0.0
      %434 = vmatpush1.msra.mxu0 0.0
      %435 = vmatprep.subr.mxu0 0.0
      %436 = vmatpush1.msra.mxu0 0.0
      %437 = vmatprep.subr.mxu0 0.0
      %438 = vmatpush1.msra.mxu0 0.0
      %439 = vmatprep.subr.mxu0 0.0
      %440 = vmatpush1.msra.mxu0 0.0
      %441 = vmatprep.subr.mxu0 0.0
      %442 = vmatpush1.msra.mxu0 0.0
      %443 = vmatprep.subr.mxu0 0.0
      %444 = vmatpush1.msra.mxu0 0.0
      %445 = vmatprep.subr.mxu0 0.0
      %446 = vmatpush1.msra.mxu0 0.0
      %447 = vmatprep.subr.mxu0 0.0
      %448 = vmatpush1.msra.mxu0 0.0
      %449 = vmatprep.subr.mxu0 0.0
      %450 = vmatpush1.msra.mxu0 0.0
      %451 = vmatprep.subr.mxu0 0.0
      %452 = vmatpush1.msra.mxu0 0.0
      %453 = vmatprep.subr.mxu0 0.0
      %454 = vmatpush1.msra.mxu0 0.0
      %455 = vmatprep.subr.mxu0 0.0
      %456 = vmatpush1.msra.mxu0 0.0
      %457 = vmatprep.mubr.f32.mxu0 0.0
      %458 = vmatmul.mubr.f32.gmra.mrb[0].mxu0 %v294
      %v459 = vpop.f32.mrb[0].mxu0
      %v460 = vadd.f32 %v290, %v459
      %v461 = vpop.f32.mrb[0].mxu0
      %462 = vmatprep.mubr.f32.mxu0 0.0
      %463 = vmatmul.mubr.f32.gmra.mrb[0].mxu0 %v297
      %v464 = vpop.f32.mrb[0].mxu0
      %v465 = vadd.f32 %v290, %v464
      %v466 = vpop.f32.mrb[0].mxu0
      %467 = vmatprep.mubr.f32.mxu0 0.0
      %468 = vmatmul.mubr.f32.gmra.mrb[0].mxu0 %v300
      %v469 = vpop.f32.mrb[0].mxu0
      %v470 = vadd.f32 %v290, %v469
      %v471 = vpop.f32.mrb[0].mxu0
      %472 = vmatprep.mubr.f32.mxu0 0.0
      %473 = vmatmul.mubr.f32.gmra.mrb[0].mxu0 %v303
      %v474 = vpop.f32.mrb[0].mxu0
      %v475 = vadd.f32 %v290, %v474
      %v476 = vpop.f32.mrb[0].mxu0
      %477 = vmatprep.mubr.f32.mxu0 0.0
      %478 = vmatmul.mubr.f32.gmra.mrb[0].mxu0 %v306
      %v479 = vpop.f32.mrb[0].mxu0
      %v480 = vadd.f32 %v290, %v479
      %v481 = vpop.f32.mrb[0].mxu0
      %482 = vmatprep.mubr.f32.mxu0 0.0
      %483 = vmatmul.mubr.f32.gmra.mrb[0].mxu0 %v309
      %v484 = vpop.f32.mrb[0].mxu0
      %v485 = vadd.f32 %v290, %v484
      %v486 = vpop.f32.mrb[0].mxu0
      %487 = vmatprep.mubr.f32.mxu0 0.0
      %488 = vmatmul.mubr.f32.gmra.mrb[0].mxu0 %v312
      %v489 = vpop.f32.mrb[0].mxu0
      %v490 = vadd.f32 %v290, %v489
      %v491 = vpop.f32.mrb[0].mxu0
      %492 = vmatprep.mubr.f32.mxu0 0.0
      %493 = vmatmul.mubr.f32.gmra.mrb[0].mxu0 %v315
      %v494 = vpop.f32.mrb[0].mxu0
      %v495 = vadd.f32 %v290, %v494
      %v496 = vpop.f32.mrb[0].mxu0
      %497 = vmatprep.mubr.f32.mxu0 0.0
      %498 = vmatmul.mubr.f32.gmra.mrb[0].mxu0 %v318
      %v499 = vpop.f32.mrb[0].mxu0
      %v500 = vadd.f32 %v290, %v499
      %v501 = vpop.f32.mrb[0].mxu0
      %502 = vmatprep.mubr.f32.mxu0 0.0
      %503 = vmatmul.mubr.f32.gmra.mrb[0].mxu0 %v321
      %v504 = vpop.f32.mrb[0].mxu0
      %v505 = vadd.f32 %v290, %v504
      %v506 = vpop.f32.mrb[0].mxu0
      %507 = vmatprep.mubr.f32.mxu0 0.0
      %508 = vmatmul.mubr.f32.gmra.mrb[0].mxu0 %v324
      %v509 = vpop.f32.mrb[0].mxu0
      %v510 = vadd.f32 %v290, %v509
      %v511 = vpop.f32.mrb[0].mxu0
      %512 = vmatprep.mubr.f32.mxu0 0.0
      %513 = vmatmul.mubr.f32.gmra.mrb[0].mxu0 %v327
      %v514 = vpop.f32.mrb[0].mxu0
      %v515 = vadd.f32 %v290, %v514
      %v516 = vpop.f32.mrb[0].mxu0
      %517 = vmatprep.mubr.f32.mxu0 0.0
      %518 = vmatmul.mubr.f32.gmra.mrb[0].mxu0 %v330
      %v519 = vpop.f32.mrb[0].mxu0
      %v520 = vadd.f32 %v290, %v519
      %v521 = vpop.f32.mrb[0].mxu0
      %522 = vmatprep.mubr.f32.mxu0 0.0
      %523 = vmatmul.mubr.f32.gmra.mrb[0].mxu0 %v333
      %v524 = vpop.f32.mrb[0].mxu0
      %v525 = vadd.f32 %v290, %v524
      %v526 = vpop.f32.mrb[0].mxu0
      %527 = vmatprep.mubr.f32.mxu0 0.0
      %528 = vmatmul.mubr.f32.gmra.mrb[0].mxu0 %v336
      %v529 = vpop.f32.mrb[0].mxu0
      %v530 = vadd.f32 %v290, %v529
      %v531 = vpop.f32.mrb[0].mxu0
      %532 = vmatprep.mubr.f32.mxu0 0.0
      %533 = vmatmul.mubr.f32.gmra.mrb[0].mxu0 %v339
      %v534 = vpop.f32.mrb[0].mxu0
      %v535 = vadd.f32 %v290, %v534
      %v536 = vpop.f32.mrb[0].mxu0
      %537 = vmatprep.mubr.f32.mxu0 0.0
      %538 = vmatmul.mubr.f32.gmra.mrb[0].mxu0 %v342
      %v539 = vpop.f32.mrb[0].mxu0
      %v540 = vadd.f32 %v290, %v539
      %v541 = vpop.f32.mrb[0].mxu0
      %542 = vmatprep.mubr.f32.mxu0 0.0
      %543 = vmatmul.mubr.f32.gmra.mrb[0].mxu0 %v345
      %v544 = vpop.f32.mrb[0].mxu0
      %v545 = vadd.f32 %v290, %v544
      %v546 = vpop.f32.mrb[0].mxu0
      %547 = vmatprep.mubr.f32.mxu0 0.0
      %548 = vmatmul.mubr.f32.gmra.mrb[0].mxu0 %v348
      %v549 = vpop.f32.mrb[0].mxu0
      %v550 = vadd.f32 %v290, %v549
      %v551 = vpop.f32.mrb[0].mxu0
      %552 = vmatprep.mubr.f32.mxu0 0.0
      %553 = vmatmul.mubr.f32.gmra.mrb[0].mxu0 %v351
      %v554 = vpop.f32.mrb[0].mxu0
      %v555 = vadd.f32 %v290, %v554
      %v556 = vpop.f32.mrb[0].mxu0
      %557 = vmatprep.mubr.f32.mxu0 0.0
      %558 = vmatmul.mubr.f32.gmra.mrb[0].mxu0 %v354
      %v559 = vpop.f32.mrb[0].mxu0
      %v560 = vadd.f32 %v290, %v559
      %v561 = vpop.f32.mrb[0].mxu0
      %562 = vmatprep.mubr.f32.mxu0 0.0
      %563 = vmatmul.mubr.f32.gmra.mrb[0].mxu0 %v357
      %v564 = vpop.f32.mrb[0].mxu0
      %v565 = vadd.f32 %v290, %v564
      %v566 = vpop.f32.mrb[0].mxu0
      %567 = vmatprep.mubr.f32.mxu0 0.0
      %568 = vmatmul.mubr.f32.gmra.mrb[0].mxu0 %v360
      %v569 = vpop.f32.mrb[0].mxu0
      %v570 = vadd.f32 %v290, %v569
      %v571 = vpop.f32.mrb[0].mxu0
      %572 = vmatprep.mubr.f32.mxu0 0.0
      %573 = vmatmul.mubr.f32.gmra.mrb[0].mxu0 %v363
      %v574 = vpop.f32.mrb[0].mxu0
      %v575 = vadd.f32 %v290, %v574
      %v576 = vpop.f32.mrb[0].mxu0
      %577 = vmatprep.mubr.f32.mxu0 0.0
      %578 = vmatmul.mubr.f32.gmra.mrb[0].mxu0 %v366
      %v579 = vpop.f32.mrb[0].mxu0
      %v580 = vadd.f32 %v290, %v579
      %v581 = vpop.f32.mrb[0].mxu0
      %582 = vmatprep.mubr.f32.mxu0 0.0
      %583 = vmatmul.mubr.f32.gmra.mrb[0].mxu0 %v369
      %v584 = vpop.f32.mrb[0].mxu0
      %v585 = vadd.f32 %v290, %v584
      %v586 = vpop.f32.mrb[0].mxu0
      %587 = vmatprep.mubr.f32.mxu0 0.0
      %588 = vmatmul.mubr.f32.gmra.mrb[0].mxu0 %v372
      %v589 = vpop.f32.mrb[0].mxu0
      %v590 = vadd.f32 %v290, %v589
      %v591 = vpop.f32.mrb[0].mxu0
      %592 = vmatprep.mubr.f32.mxu0 0.0
      %593 = vmatmul.mubr.f32.gmra.mrb[0].mxu0 %v375
      %v594 = vpop.f32.mrb[0].mxu0
      %v595 = vadd.f32 %v290, %v594
      %v596 = vpop.f32.mrb[0].mxu0
      %597 = vmatprep.mubr.f32.mxu0 0.0
      %598 = vmatmul.mubr.f32.gmra.mrb[0].mxu0 %v378
      %v599 = vpop.f32.mrb[0].mxu0
      %v600 = vadd.f32 %v290, %v599
      %v601 = vpop.f32.mrb[0].mxu0
      %602 = vmatprep.mubr.f32.mxu0 0.0
      %603 = vmatmul.mubr.f32.gmra.mrb[0].mxu0 %v381
      %v604 = vpop.f32.mrb[0].mxu0
      %v605 = vadd.f32 %v290, %v604
      %v606 = vpop.f32.mrb[0].mxu0
      %607 = vmatprep.mubr.f32.mxu0 0.0
      %608 = vmatmul.mubr.f32.gmra.mrb[0].mxu0 %v384
      %v609 = vpop.f32.mrb[0].mxu0
      %v610 = vadd.f32 %v290, %v609
      %v611 = vpop.f32.mrb[0].mxu0
      %612 = vmatprep.mubr.f32.mxu0 0.0
      %613 = vmatmul.mubr.f32.gmra.mrb[0].mxu0 %v387
      %v614 = vpop.f32.mrb[0].mxu0
      %v615 = vadd.f32 %v290, %v614
      %v616 = vpop.f32.mrb[0].mxu0
      %617 = vdwg.mxu0
      %v618 = vmax.f32 %v460, 0.0
      %v619 = vmax.f32 %v465, 0.0
      %v620 = vmax.f32 %v470, 0.0
      %v621 = vmax.f32 %v475, 0.0
      %v622 = vmax.f32 %v480, 0.0
      %v623 = vmax.f32 %v485, 0.0
      %v624 = vmax.f32 %v490, 0.0
      %v625 = vmax.f32 %v495, 0.0
      %v626 = vmax.f32 %v500, 0.0
      %v627 = vmax.f32 %v505, 0.0
      %v628 = vmax.f32 %v510, 0.0
      %v629 = vmax.f32 %v515, 0.0
      %v630 = vmax.f32 %v520, 0.0
      %v631 = vmax.f32 %v525, 0.0
      %v632 = vmax.f32 %v530, 0.0
      %v633 = vmax.f32 %v535, 0.0
      %v634 = vmax.f32 %v540, 0.0
      %v635 = vmax.f32 %v545, 0.0
      %v636 = vmax.f32 %v550, 0.0
      %v637 = vmax.f32 %v555, 0.0
      %v638 = vmax.f32 %v560, 0.0
      %v639 = vmax.f32 %v565, 0.0
      %v640 = vmax.f32 %v570, 0.0
      %v641 = vmax.f32 %v575, 0.0
      %v642 = vmax.f32 %v580, 0.0
      %v643 = vmax.f32 %v585, 0.0
      %v644 = vmax.f32 %v590, 0.0
      %v645 = vmax.f32 %v595, 0.0
      %v646 = vmax.f32 %v600, 0.0
      %v647 = vmax.f32 %v605, 0.0
      %v648 = vmax.f32 %v610, 0.0
      %v649 = vmax.f32 %v615, 0.0
      %650 = vst.msk [vmem:[#allocation2] sm:$0xff] %vm292, 0.0
      %651 = vst.msk [vmem:[#allocation2 + $0x8] sm:$0xff] %vm292, 0.0
      %vm652 = vcmask 9216
      %653 = vst.msk [vmem:[#allocation2 + $0x10] sm:$0x3] %vm652, 0.0
      %s654 = scalar_lea.vmem [#allocation2], 408
      %655 = vst.msk [vmem:[%s654] sm:$0xff] %vm292, 0.0
      %656 = vst.msk [vmem:[%s654 + $0x8] sm:$0xff] %vm292, 0.0
      %657 = vst.msk [vmem:[%s654 + $0x10] sm:$0x3] %vm652, 0.0
      %vm658 = vcmask 8192
      %659 = vst.msk [vmem:[#allocation2] sm:$0x1] %vm658, 0.0
      %660 = vst.msk [vmem:[#allocation2 + $0x18] sm:$0x1] %vm658, 0.0
      %661 = vst.msk [vmem:[#allocation2 + $0x30] sm:$0x1] %vm658, 0.0
      %662 = vst.msk [vmem:[#allocation2 + $0x48] sm:$0x1] %vm658, 0.0
      %663 = vst.msk [vmem:[#allocation2 + $0x60] sm:$0x1] %vm658, 0.0
      %664 = vst.msk [vmem:[#allocation2 + $0x78] sm:$0x1] %vm658, 0.0
      %665 = vst.msk [vmem:[#allocation2 + $0x90] sm:$0x1] %vm658, 0.0
      %666 = vst.msk [vmem:[#allocation2 + $0xa8] sm:$0x1] %vm658, 0.0
      %667 = vst.msk [vmem:[#allocation2 + $0xc0] sm:$0x1] %vm658, 0.0
      %668 = vst.msk [vmem:[#allocation2 + $0xd8] sm:$0x1] %vm658, 0.0
      %669 = vst.msk [vmem:[#allocation2 + $0xf0] sm:$0x1] %vm658, 0.0
      %670 = vst.msk [vmem:[#allocation2 + $0x108] sm:$0x1] %vm658, 0.0
      %671 = vst.msk [vmem:[#allocation2 + $0x120] sm:$0x1] %vm658, 0.0
      %672 = vst.msk [vmem:[#allocation2 + $0x138] sm:$0x1] %vm658, 0.0
      %673 = vst.msk [vmem:[#allocation2 + $0x150] sm:$0x1] %vm658, 0.0
      %674 = vst.msk [vmem:[#allocation2 + $0x168] sm:$0x1] %vm658, 0.0
      %675 = vst.msk [vmem:[#allocation2 + $0x180] sm:$0x1] %vm658, 0.0
      %676 = vst.msk [vmem:[#allocation2 + $0x198] sm:$0x1] %vm658, 0.0
      %677 = vst.msk [vmem:[#allocation2 + $0x11] sm:$0x1] %vm658, 0.0
      %678 = vst.msk [vmem:[#allocation2 + $0x29] sm:$0x1] %vm658, 0.0
      %679 = vst.msk [vmem:[#allocation2 + $0x41] sm:$0x1] %vm658, 0.0
      %680 = vst.msk [vmem:[#allocation2 + $0x59] sm:$0x1] %vm658, 0.0
      %681 = vst.msk [vmem:[#allocation2 + $0x71] sm:$0x1] %vm658, 0.0
      %682 = vst.msk [vmem:[#allocation2 + $0x89] sm:$0x1] %vm658, 0.0
      %683 = vst.msk [vmem:[#allocation2 + $0xa1] sm:$0x1] %vm658, 0.0
      %684 = vst.msk [vmem:[#allocation2 + $0xb9] sm:$0x1] %vm658, 0.0
      %685 = vst.msk [vmem:[#allocation2 + $0xd1] sm:$0x1] %vm658, 0.0
      %686 = vst.msk [vmem:[#allocation2 + $0xe9] sm:$0x1] %vm658, 0.0
      %687 = vst.msk [vmem:[#allocation2 + $0x101] sm:$0x1] %vm658, 0.0
      %688 = vst.msk [vmem:[#allocation2 + $0x119] sm:$0x1] %vm658, 0.0
      %689 = vst.msk [vmem:[#allocation2 + $0x131] sm:$0x1] %vm658, 0.0
      %690 = vst.msk [vmem:[#allocation2 + $0x149] sm:$0x1] %vm658, 0.0
      %691 = vst.msk [vmem:[#allocation2 + $0x161] sm:$0x1] %vm658, 0.0
      %692 = vst.msk [vmem:[#allocation2 + $0x179] sm:$0x1] %vm658, 0.0
      %693 = vst.msk [vmem:[#allocation2 + $0x191] sm:$0x1] %vm658, 0.0
      %694 = vst.msk [vmem:[#allocation2 + $0x1a9] sm:$0x1] %vm658, 0.0
      %s695 = scalar_lea.vmem [#allocation2], 24
      %696 = vst.msk [vmem:[%s695 + $0x1] sm:$0xff] %vm292, %v618
      %697 = vst.msk [vmem:[%s695 + $0x9] sm:$0xff] %vm292, %v619
      %698 = vst.msk [vmem:[%s695 + $0x19] sm:$0xff] %vm292, %v620
      %699 = vst.msk [vmem:[%s695 + $0x21] sm:$0xff] %vm292, %v621
      %700 = vst.msk [vmem:[%s695 + $0x31] sm:$0xff] %vm292, %v622
      %701 = vst.msk [vmem:[%s695 + $0x39] sm:$0xff] %vm292, %v623
      %702 = vst.msk [vmem:[%s695 + $0x49] sm:$0xff] %vm292, %v624
      %703 = vst.msk [vmem:[%s695 + $0x51] sm:$0xff] %vm292, %v625
      %704 = vst.msk [vmem:[%s695 + $0x61] sm:$0xff] %vm292, %v626
      %705 = vst.msk [vmem:[%s695 + $0x69] sm:$0xff] %vm292, %v627
      %706 = vst.msk [vmem:[%s695 + $0x79] sm:$0xff] %vm292, %v628
      %707 = vst.msk [vmem:[%s695 + $0x81] sm:$0xff] %vm292, %v629
      %708 = vst.msk [vmem:[%s695 + $0x91] sm:$0xff] %vm292, %v630
      %709 = vst.msk [vmem:[%s695 + $0x99] sm:$0xff] %vm292, %v631
      %710 = vst.msk [vmem:[%s695 + $0xa9] sm:$0xff] %vm292, %v632
      %711 = vst.msk [vmem:[%s695 + $0xb1] sm:$0xff] %vm292, %v633
      %712 = vst.msk [vmem:[%s695 + $0xc1] sm:$0xff] %vm292, %v634
      %713 = vst.msk [vmem:[%s695 + $0xc9] sm:$0xff] %vm292, %v635
      %714 = vst.msk [vmem:[%s695 + $0xd9] sm:$0xff] %vm292, %v636
      %715 = vst.msk [vmem:[%s695 + $0xe1] sm:$0xff] %vm292, %v637
      %716 = vst.msk [vmem:[%s695 + $0xf1] sm:$0xff] %vm292, %v638
      %717 = vst.msk [vmem:[%s695 + $0xf9] sm:$0xff] %vm292, %v639
      %718 = vst.msk [vmem:[%s695 + $0x109] sm:$0xff] %vm292, %v640
      %719 = vst.msk [vmem:[%s695 + $0x111] sm:$0xff] %vm292, %v641
      %720 = vst.msk [vmem:[%s695 + $0x121] sm:$0xff] %vm292, %v642
      %721 = vst.msk [vmem:[%s695 + $0x129] sm:$0xff] %vm292, %v643
      %722 = vst.msk [vmem:[%s695 + $0x139] sm:$0xff] %vm292, %v644
      %723 = vst.msk [vmem:[%s695 + $0x141] sm:$0xff] %vm292, %v645
      %724 = vst.msk [vmem:[%s695 + $0x151] sm:$0xff] %vm292, %v646
      %725 = vst.msk [vmem:[%s695 + $0x159] sm:$0xff] %vm292, %v647
      %726 = vst.msk [vmem:[%s695 + $0x169] sm:$0xff] %vm292, %v648
      %727 = vst.msk [vmem:[%s695 + $0x171] sm:$0xff] %vm292, %v649
      %v728 = vld [vmem:[#allocation2] sm:$0xff]
      %v729 = vld [vmem:[#allocation2 + $0x8] sm:$0xff]
      %v730 = vld [vmem:[#allocation2 + $0x10] sm:$0x3]
      %v731 = vld [vmem:[#allocation2 + $0x18] sm:$0xff]
      %v732 = vld [vmem:[#allocation2 + $0x20] sm:$0xff]
      %v733 = vld [vmem:[#allocation2 + $0x28] sm:$0x3]
      %v734 = vld [vmem:[#allocation2 + $0x30] sm:$0xff]
      %v735 = vld [vmem:[#allocation2 + $0x38] sm:$0xff]
      %v736 = vld [vmem:[#allocation2 + $0x40] sm:$0x3]
      %v737 = vld [vmem:[#allocation2 + $0x48] sm:$0xff]
      %v738 = vld [vmem:[#allocation2 + $0x50] sm:$0xff]
      %v739 = vld [vmem:[#allocation2 + $0x58] sm:$0x3]
      %v740 = vld [vmem:[#allocation2 + $0x60] sm:$0xff]
      %v741 = vld [vmem:[#allocation2 + $0x68] sm:$0xff]
      %v742 = vld [vmem:[#allocation2 + $0x70] sm:$0x3]
      %v743 = vld [vmem:[#allocation2 + $0x78] sm:$0xff]
      %v744 = vld [vmem:[#allocation2 + $0x80] sm:$0xff]
      %v745 = vld [vmem:[#allocation2 + $0x88] sm:$0x3]
      %v746 = vld [vmem:[#allocation2 + $0x90] sm:$0xff]
      %v747 = vld [vmem:[#allocation2 + $0x98] sm:$0xff]
      %v748 = vld [vmem:[#allocation2 + $0xa0] sm:$0x3]
      %v749 = vld [vmem:[#allocation2 + $0xa8] sm:$0xff]
      %v750 = vld [vmem:[#allocation2 + $0xb0] sm:$0xff]
      %v751 = vld [vmem:[#allocation2 + $0xb8] sm:$0x3]
      %v752 = vld [vmem:[#allocation2 + $0xc0] sm:$0xff]
      %v753 = vld [vmem:[#allocation2 + $0xc8] sm:$0xff]
      %v754 = vld [vmem:[#allocation2 + $0xd0] sm:$0x3]
      %v755 = vld [vmem:[#allocation2 + $0xd8] sm:$0xff]
      %v756 = vld [vmem:[#allocation2 + $0xe0] sm:$0xff]
      %v757 = vld [vmem:[#allocation2 + $0xe8] sm:$0x3]
      %v758 = vld [vmem:[#allocation2 + $0xf0] sm:$0xff]
      %v759 = vld [vmem:[#allocation2 + $0xf8] sm:$0xff]
      %v760 = vld [vmem:[#allocation2 + $0x100] sm:$0x3]
      %v761 = vld [vmem:[#allocation2 + $0x108] sm:$0xff]
      %v762 = vld [vmem:[#allocation2 + $0x110] sm:$0xff]
      %v763 = vld [vmem:[#allocation2 + $0x118] sm:$0x3]
      %v764 = vld [vmem:[#allocation2 + $0x120] sm:$0xff]
      %v765 = vld [vmem:[#allocation2 + $0x128] sm:$0xff]
      %v766 = vld [vmem:[#allocation2 + $0x130] sm:$0x3]
      %v767 = vld [vmem:[#allocation2 + $0x138] sm:$0xff]
      %v768 = vld [vmem:[#allocation2 + $0x140] sm:$0xff]
      %v769 = vld [vmem:[#allocation2 + $0x148] sm:$0x3]
      %v770 = vld [vmem:[#allocation2 + $0x150] sm:$0xff]
      %v771 = vld [vmem:[#allocation2 + $0x158] sm:$0xff]
      %v772 = vld [vmem:[#allocation2 + $0x160] sm:$0x3]
      %v773 = vld [vmem:[#allocation2 + $0x168] sm:$0xff]
      %v774 = vld [vmem:[#allocation2 + $0x170] sm:$0xff]
      %v775 = vld [vmem:[#allocation2 + $0x178] sm:$0x3]
      %v776 = vld [vmem:[#allocation2 + $0x180] sm:$0xff]
      %v777 = vld [vmem:[#allocation2 + $0x188] sm:$0xff]
      %v778 = vld [vmem:[#allocation2 + $0x190] sm:$0x3]
      %v779 = vld [vmem:[#allocation2 + $0x198] sm:$0xff]
      %v780 = vld [vmem:[#allocation2 + $0x1a0] sm:$0xff]
      %v781 = vld [vmem:[#allocation2 + $0x1a8] sm:$0x3]
      %v782 = vld [vmem:[%s3] sm:$0x7]
      %v783 = vld [vmem:[%s3 + $0x4] sm:$0x7]
      %v784 = vld [vmem:[%s3 + $0x8] sm:$0x7]
      %v785 = vlaneseq
      %v786 = vshrl.u32 %v785, 7
      %v787 = vsub.s32 0, %v786
      %v788 = vrot.slane %v782, %v787
      %v789 = vmul.f32 %v728, %v788
      %v790 = vmul.f32 %v729, %v788
      %v791 = vmul.f32 %v731, %v788
      %v792 = vmul.f32 %v732, %v788
      %v793 = vmul.f32 %v734, %v788
      %v794 = vmul.f32 %v735, %v788
      %v795 = vmul.f32 %v737, %v788
      %v796 = vmul.f32 %v738, %v788
      %v797 = vmul.f32 %v740, %v788
      %v798 = vmul.f32 %v741, %v788
      %v799 = vmul.f32 %v743, %v788
      %v800 = vmul.f32 %v744, %v788
      %v801 = vmul.f32 %v746, %v788
      %v802 = vmul.f32 %v747, %v788
      %v803 = vmul.f32 %v749, %v788
      %v804 = vmul.f32 %v750, %v788
      %v805 = vmul.f32 %v752, %v788
      %v806 = vmul.f32 %v753, %v788
      %v807 = vmul.f32 %v755, %v788
      %v808 = vmul.f32 %v756, %v788
      %v809 = vmul.f32 %v758, %v788
      %v810 = vmul.f32 %v759, %v788
      %v811 = vmul.f32 %v761, %v788
      %v812 = vmul.f32 %v762, %v788
      %v813 = vmul.f32 %v764, %v788
      %v814 = vmul.f32 %v765, %v788
      %v815 = vmul.f32 %v767, %v788
      %v816 = vmul.f32 %v768, %v788
      %v817 = vmul.f32 %v770, %v788
      %v818 = vmul.f32 %v771, %v788
      %v819 = vmul.f32 %v773, %v788
      %v820 = vmul.f32 %v774, %v788
      %v821 = vlaneseq
      %v822 = vshrl.u32 %v821, 7
      %v823 = vsub.s32 1, %v822
      %v824 = vrot.slane %v782, %v823
      %v825 = vmul.f32 %v728, %v824
      %v826 = vmul.f32 %v729, %v824
      %v827 = vmul.f32 %v730, %v824
      %v828 = vmul.f32 %v731, %v824
      %v829 = vmul.f32 %v732, %v824
      %v830 = vmul.f32 %v733, %v824
      %v831 = vmul.f32 %v734, %v824
      %v832 = vmul.f32 %v735, %v824
      %v833 = vmul.f32 %v736, %v824
      %v834 = vmul.f32 %v737, %v824
      %v835 = vmul.f32 %v738, %v824
      %v836 = vmul.f32 %v739, %v824
      %v837 = vmul.f32 %v740, %v824
      %v838 = vmul.f32 %v741, %v824
      %v839 = vmul.f32 %v742, %v824
      %v840 = vmul.f32 %v743, %v824
      %v841 = vmul.f32 %v744, %v824
      %v842 = vmul.f32 %v745, %v824
      %v843 = vmul.f32 %v746, %v824
      %v844 = vmul.f32 %v747, %v824
      %v845 = vmul.f32 %v748, %v824
      %v846 = vmul.f32 %v749, %v824
      %v847 = vmul.f32 %v750, %v824
      %v848 = vmul.f32 %v751, %v824
      %v849 = vmul.f32 %v752, %v824
      %v850 = vmul.f32 %v753, %v824
      %v851 = vmul.f32 %v754, %v824
      %v852 = vmul.f32 %v755, %v824
      %v853 = vmul.f32 %v756, %v824
      %v854 = vmul.f32 %v757, %v824
      %v855 = vmul.f32 %v758, %v824
      %v856 = vmul.f32 %v759, %v824
      %v857 = vmul.f32 %v760, %v824
      %v858 = vmul.f32 %v761, %v824
      %v859 = vmul.f32 %v762, %v824
      %v860 = vmul.f32 %v763, %v824
      %v861 = vmul.f32 %v764, %v824
      %v862 = vmul.f32 %v765, %v824
      %v863 = vmul.f32 %v766, %v824
      %v864 = vmul.f32 %v767, %v824
      %v865 = vmul.f32 %v768, %v824
      %v866 = vmul.f32 %v769, %v824
      %v867 = vmul.f32 %v770, %v824
      %v868 = vmul.f32 %v771, %v824
      %v869 = vmul.f32 %v772, %v824
      %v870 = vmul.f32 %v773, %v824
      %v871 = vmul.f32 %v774, %v824
      %v872 = vmul.f32 %v775, %v824
      %vm921 = vcmask 1046528
      %v922 = vrot.slane %v825, 1
      %v923 = vrot.slane %v826, 1
      %v924 = vsel %vm921, %v922, %v923
      %v925 = vrot.slane %v827, 1
      %v926 = vsel %vm921, %v923, %v925
      %v927 = vrot.slane %v828, 1
      %v928 = vrot.slane %v829, 1
      %v929 = vsel %vm921, %v927, %v928
      %v930 = vrot.slane %v830, 1
      %v931 = vsel %vm921, %v928, %v930
      %v932 = vrot.slane %v831, 1
      %v933 = vrot.slane %v832, 1
      %v934 = vsel %vm921, %v932, %v933
      %v935 = vrot.slane %v833, 1
      %v936 = vsel %vm921, %v933, %v935
      %v937 = vrot.slane %v834, 1
      %v938 = vrot.slane %v835, 1
      %v939 = vsel %vm921, %v937, %v938
      %v940 = vrot.slane %v836, 1
      %v941 = vsel %vm921, %v938, %v940
      %v942 = vrot.slane %v837, 1
      %v943 = vrot.slane %v838, 1
      %v944 = vsel %vm921, %v942, %v943
      %v945 = vrot.slane %v839, 1
      %v946 = vsel %vm921, %v943, %v945
      %v947 = vrot.slane %v840, 1
      %v948 = vrot.slane %v841, 1
      %v949 = vsel %vm921, %v947, %v948
      %v950 = vrot.slane %v842, 1
      %v951 = vsel %vm921, %v948, %v950
      %v952 = vrot.slane %v843, 1
      %v953 = vrot.slane %v844, 1
      %v954 = vsel %vm921, %v952, %v953
      %v955 = vrot.slane %v845, 1
      %v956 = vsel %vm921, %v953, %v955
      %v957 = vrot.slane %v846, 1
      %v958 = vrot.slane %v847, 1
      %v959 = vsel %vm921, %v957, %v958
      %v960 = vrot.slane %v848, 1
      %v961 = vsel %vm921, %v958, %v960
      %v962 = vrot.slane %v849, 1
      %v963 = vrot.slane %v850, 1
      %v964 = vsel %vm921, %v962, %v963
      %v965 = vrot.slane %v851, 1
      %v966 = vsel %vm921, %v963, %v965
      %v967 = vrot.slane %v852, 1
      %v968 = vrot.slane %v853, 1
      %v969 = vsel %vm921, %v967, %v968
      %v970 = vrot.slane %v854, 1
      %v971 = vsel %vm921, %v968, %v970
      %v972 = vrot.slane %v855, 1
      %v973 = vrot.slane %v856, 1
      %v974 = vsel %vm921, %v972, %v973
      %v975 = vrot.slane %v857, 1
      %v976 = vsel %vm921, %v973, %v975
      %v977 = vrot.slane %v858, 1
      %v978 = vrot.slane %v859, 1
      %v979 = vsel %vm921, %v977, %v978
      %v980 = vrot.slane %v860, 1
      %v981 = vsel %vm921, %v978, %v980
      %v982 = vrot.slane %v861, 1
      %v983 = vrot.slane %v862, 1
      %v984 = vsel %vm921, %v982, %v983
      %v985 = vrot.slane %v863, 1
      %v986 = vsel %vm921, %v983, %v985
      %v987 = vrot.slane %v864, 1
      %v988 = vrot.slane %v865, 1
      %v989 = vsel %vm921, %v987, %v988
      %v990 = vrot.slane %v866, 1
      %v991 = vsel %vm921, %v988, %v990
      %v992 = vrot.slane %v867, 1
      %v993 = vrot.slane %v868, 1
      %v994 = vsel %vm921, %v992, %v993
      %v995 = vrot.slane %v869, 1
      %v996 = vsel %vm921, %v993, %v995
      %v997 = vrot.slane %v870, 1
      %v998 = vrot.slane %v871, 1
      %v999 = vsel %vm921, %v997, %v998
      %v1000 = vrot.slane %v872, 1
      %v1001 = vsel %vm921, %v998, %v1000
      %v1034 = vadd.f32 %v789, %v924
      %v1035 = vadd.f32 %v790, %v926
      %v1036 = vadd.f32 %v791, %v929
      %v1037 = vadd.f32 %v792, %v931
      %v1038 = vadd.f32 %v793, %v934
      %v1039 = vadd.f32 %v794, %v936
      %v1040 = vadd.f32 %v795, %v939
      %v1041 = vadd.f32 %v796, %v941
      %v1042 = vadd.f32 %v797, %v944
      %v1043 = vadd.f32 %v798, %v946
      %v1044 = vadd.f32 %v799, %v949
      %v1045 = vadd.f32 %v800, %v951
      %v1046 = vadd.f32 %v801, %v954
      %v1047 = vadd.f32 %v802, %v956
      %v1048 = vadd.f32 %v803, %v959
      %v1049 = vadd.f32 %v804, %v961
      %v1050 = vadd.f32 %v805, %v964
      %v1051 = vadd.f32 %v806, %v966
      %v1052 = vadd.f32 %v807, %v969
      %v1053 = vadd.f32 %v808, %v971
      %v1054 = vadd.f32 %v809, %v974
      %v1055 = vadd.f32 %v810, %v976
      %v1056 = vadd.f32 %v811, %v979
      %v1057 = vadd.f32 %v812, %v981
      %v1058 = vadd.f32 %v813, %v984
      %v1059 = vadd.f32 %v814, %v986
      %v1060 = vadd.f32 %v815, %v989
      %v1061 = vadd.f32 %v816, %v991
      %v1062 = vadd.f32 %v817, %v994
      %v1063 = vadd.f32 %v818, %v996
      %v1064 = vadd.f32 %v819, %v999
      %v1065 = vadd.f32 %v820, %v1001
      %v1066 = vlaneseq
      %v1067 = vshrl.u32 %v1066, 7
      %v1068 = vsub.s32 2, %v1067
      %v1069 = vrot.slane %v782, %v1068
      %v1070 = vmul.f32 %v728, %v1069
      %v1071 = vmul.f32 %v729, %v1069
      %v1072 = vmul.f32 %v730, %v1069
      %v1073 = vmul.f32 %v731, %v1069
      %v1074 = vmul.f32 %v732, %v1069
      %v1075 = vmul.f32 %v733, %v1069
      %v1076 = vmul.f32 %v734, %v1069
      %v1077 = vmul.f32 %v735, %v1069
      %v1078 = vmul.f32 %v736, %v1069
      %v1079 = vmul.f32 %v737, %v1069
      %v1080 = vmul.f32 %v738, %v1069
      %v1081 = vmul.f32 %v739, %v1069
      %v1082 = vmul.f32 %v740, %v1069
      %v1083 = vmul.f32 %v741, %v1069
      %v1084 = vmul.f32 %v742, %v1069
      %v1085 = vmul.f32 %v743, %v1069
      %v1086 = vmul.f32 %v744, %v1069
      %v1087 = vmul.f32 %v745, %v1069
      %v1088 = vmul.f32 %v746, %v1069
      %v1089 = vmul.f32 %v747, %v1069
      %v1090 = vmul.f32 %v748, %v1069
      %v1091 = vmul.f32 %v749, %v1069
      %v1092 = vmul.f32 %v750, %v1069
      %v1093 = vmul.f32 %v751, %v1069
      %v1094 = vmul.f32 %v752, %v1069
      %v1095 = vmul.f32 %v753, %v1069
      %v1096 = vmul.f32 %v754, %v1069
      %v1097 = vmul.f32 %v755, %v1069
      %v1098 = vmul.f32 %v756, %v1069
      %v1099 = vmul.f32 %v757, %v1069
      %v1100 = vmul.f32 %v758, %v1069
      %v1101 = vmul.f32 %v759, %v1069
      %v1102 = vmul.f32 %v760, %v1069
      %v1103 = vmul.f32 %v761, %v1069
      %v1104 = vmul.f32 %v762, %v1069
      %v1105 = vmul.f32 %v763, %v1069
      %v1106 = vmul.f32 %v764, %v1069
      %v1107 = vmul.f32 %v765, %v1069
      %v1108 = vmul.f32 %v766, %v1069
      %v1109 = vmul.f32 %v767, %v1069
      %v1110 = vmul.f32 %v768, %v1069
      %v1111 = vmul.f32 %v769, %v1069
      %v1112 = vmul.f32 %v770, %v1069
      %v1113 = vmul.f32 %v771, %v1069
      %v1114 = vmul.f32 %v772, %v1069
      %v1115 = vmul.f32 %v773, %v1069
      %v1116 = vmul.f32 %v774, %v1069
      %v1117 = vmul.f32 %v775, %v1069
      %vm1166 = vcmask 1045504
      %v1167 = vrot.slane %v1070, 2
      %v1168 = vrot.slane %v1071, 2
      %v1169 = vsel %vm1166, %v1167, %v1168
      %v1170 = vrot.slane %v1072, 2
      %v1171 = vsel %vm1166, %v1168, %v1170
      %v1172 = vrot.slane %v1073, 2
      %v1173 = vrot.slane %v1074, 2
      %v1174 = vsel %vm1166, %v1172, %v1173
      %v1175 = vrot.slane %v1075, 2
      %v1176 = vsel %vm1166, %v1173, %v1175
      %v1177 = vrot.slane %v1076, 2
      %v1178 = vrot.slane %v1077, 2
      %v1179 = vsel %vm1166, %v1177, %v1178
      %v1180 = vrot.slane %v1078, 2
      %v1181 = vsel %vm1166, %v1178, %v1180
      %v1182 = vrot.slane %v1079, 2
      %v1183 = vrot.slane %v1080, 2
      %v1184 = vsel %vm1166, %v1182, %v1183
      %v1185 = vrot.slane %v1081, 2
      %v1186 = vsel %vm1166, %v1183, %v1185
      %v1187 = vrot.slane %v1082, 2
      %v1188 = vrot.slane %v1083, 2
      %v1189 = vsel %vm1166, %v1187, %v1188
      %v1190 = vrot.slane %v1084, 2
      %v1191 = vsel %vm1166, %v1188, %v1190
      %v1192 = vrot.slane %v1085, 2
      %v1193 = vrot.slane %v1086, 2
      %v1194 = vsel %vm1166, %v1192, %v1193
      %v1195 = vrot.slane %v1087, 2
      %v1196 = vsel %vm1166, %v1193, %v1195
      %v1197 = vrot.slane %v1088, 2
      %v1198 = vrot.slane %v1089, 2
      %v1199 = vsel %vm1166, %v1197, %v1198
      %v1200 = vrot.slane %v1090, 2
      %v1201 = vsel %vm1166, %v1198, %v1200
      %v1202 = vrot.slane %v1091, 2
      %v1203 = vrot.slane %v1092, 2
      %v1204 = vsel %vm1166, %v1202, %v1203
      %v1205 = vrot.slane %v1093, 2
      %v1206 = vsel %vm1166, %v1203, %v1205
      %v1207 = vrot.slane %v1094, 2
      %v1208 = vrot.slane %v1095, 2
      %v1209 = vsel %vm1166, %v1207, %v1208
      %v1210 = vrot.slane %v1096, 2
      %v1211 = vsel %vm1166, %v1208, %v1210
      %v1212 = vrot.slane %v1097, 2
      %v1213 = vrot.slane %v1098, 2
      %v1214 = vsel %vm1166, %v1212, %v1213
      %v1215 = vrot.slane %v1099, 2
      %v1216 = vsel %vm1166, %v1213, %v1215
      %v1217 = vrot.slane %v1100, 2
      %v1218 = vrot.slane %v1101, 2
      %v1219 = vsel %vm1166, %v1217, %v1218
      %v1220 = vrot.slane %v1102, 2
      %v1221 = vsel %vm1166, %v1218, %v1220
      %v1222 = vrot.slane %v1103, 2
      %v1223 = vrot.slane %v1104, 2
      %v1224 = vsel %vm1166, %v1222, %v1223
      %v1225 = vrot.slane %v1105, 2
      %v1226 = vsel %vm1166, %v1223, %v1225
      %v1227 = vrot.slane %v1106, 2
      %v1228 = vrot.slane %v1107, 2
      %v1229 = vsel %vm1166, %v1227, %v1228
      %v1230 = vrot.slane %v1108, 2
      %v1231 = vsel %vm1166, %v1228, %v1230
      %v1232 = vrot.slane %v1109, 2
      %v1233 = vrot.slane %v1110, 2
      %v1234 = vsel %vm1166, %v1232, %v1233
      %v1235 = vrot.slane %v1111, 2
      %v1236 = vsel %vm1166, %v1233, %v1235
      %v1237 = vrot.slane %v1112, 2
      %v1238 = vrot.slane %v1113, 2
      %v1239 = vsel %vm1166, %v1237, %v1238
      %v1240 = vrot.slane %v1114, 2
      %v1241 = vsel %vm1166, %v1238, %v1240
      %v1242 = vrot.slane %v1115, 2
      %v1243 = vrot.slane %v1116, 2
      %v1244 = vsel %vm1166, %v1242, %v1243
      %v1245 = vrot.slane %v1117, 2
      %v1246 = vsel %vm1166, %v1243, %v1245
      %v1279 = vadd.f32 %v1034, %v1169
      %v1280 = vadd.f32 %v1035, %v1171
      %v1281 = vadd.f32 %v1036, %v1174
      %v1282 = vadd.f32 %v1037, %v1176
      %v1283 = vadd.f32 %v1038, %v1179
      %v1284 = vadd.f32 %v1039, %v1181
      %v1285 = vadd.f32 %v1040, %v1184
      %v1286 = vadd.f32 %v1041, %v1186
      %v1287 = vadd.f32 %v1042, %v1189
      %v1288 = vadd.f32 %v1043, %v1191
      %v1289 = vadd.f32 %v1044, %v1194
      %v1290 = vadd.f32 %v1045, %v1196
      %v1291 = vadd.f32 %v1046, %v1199
      %v1292 = vadd.f32 %v1047, %v1201
      %v1293 = vadd.f32 %v1048, %v1204
      %v1294 = vadd.f32 %v1049, %v1206
      %v1295 = vadd.f32 %v1050, %v1209
      %v1296 = vadd.f32 %v1051, %v1211
      %v1297 = vadd.f32 %v1052, %v1214
      %v1298 = vadd.f32 %v1053, %v1216
      %v1299 = vadd.f32 %v1054, %v1219
      %v1300 = vadd.f32 %v1055, %v1221
      %v1301 = vadd.f32 %v1056, %v1224
      %v1302 = vadd.f32 %v1057, %v1226
      %v1303 = vadd.f32 %v1058, %v1229
      %v1304 = vadd.f32 %v1059, %v1231
      %v1305 = vadd.f32 %v1060, %v1234
      %v1306 = vadd.f32 %v1061, %v1236
      %v1307 = vadd.f32 %v1062, %v1239
      %v1308 = vadd.f32 %v1063, %v1241
      %v1309 = vadd.f32 %v1064, %v1244
      %v1310 = vadd.f32 %v1065, %v1246
      %v1311 = vlaneseq
      %v1312 = vshrl.u32 %v1311, 7
      %v1313 = vsub.s32 0, %v1312
      %v1314 = vrot.slane %v783, %v1313
      %v1315 = vmul.f32 %v731, %v1314
      %v1316 = vmul.f32 %v732, %v1314
      %v1317 = vmul.f32 %v734, %v1314
      %v1318 = vmul.f32 %v735, %v1314
      %v1319 = vmul.f32 %v737, %v1314
      %v1320 = vmul.f32 %v738, %v1314
      %v1321 = vmul.f32 %v740, %v1314
      %v1322 = vmul.f32 %v741, %v1314
      %v1323 = vmul.f32 %v743, %v1314
      %v1324 = vmul.f32 %v744, %v1314
      %v1325 = vmul.f32 %v746, %v1314
      %v1326 = vmul.f32 %v747, %v1314
      %v1327 = vmul.f32 %v749, %v1314
      %v1328 = vmul.f32 %v750, %v1314
      %v1329 = vmul.f32 %v752, %v1314
      %v1330 = vmul.f32 %v753, %v1314
      %v1331 = vmul.f32 %v755, %v1314
      %v1332 = vmul.f32 %v756, %v1314
      %v1333 = vmul.f32 %v758, %v1314
      %v1334 = vmul.f32 %v759, %v1314
      %v1335 = vmul.f32 %v761, %v1314
      %v1336 = vmul.f32 %v762, %v1314
      %v1337 = vmul.f32 %v764, %v1314
      %v1338 = vmul.f32 %v765, %v1314
      %v1339 = vmul.f32 %v767, %v1314
      %v1340 = vmul.f32 %v768, %v1314
      %v1341 = vmul.f32 %v770, %v1314
      %v1342 = vmul.f32 %v771, %v1314
      %v1343 = vmul.f32 %v773, %v1314
      %v1344 = vmul.f32 %v774, %v1314
      %v1345 = vmul.f32 %v776, %v1314
      %v1346 = vmul.f32 %v777, %v1314
      %v1347 = vadd.f32 %v1279, %v1315
      %v1348 = vadd.f32 %v1280, %v1316
      %v1349 = vadd.f32 %v1281, %v1317
      %v1350 = vadd.f32 %v1282, %v1318
      %v1351 = vadd.f32 %v1283, %v1319
      %v1352 = vadd.f32 %v1284, %v1320
      %v1353 = vadd.f32 %v1285, %v1321
      %v1354 = vadd.f32 %v1286, %v1322
      %v1355 = vadd.f32 %v1287, %v1323
      %v1356 = vadd.f32 %v1288, %v1324
      %v1357 = vadd.f32 %v1289, %v1325
      %v1358 = vadd.f32 %v1290, %v1326
      %v1359 = vadd.f32 %v1291, %v1327
      %v1360 = vadd.f32 %v1292, %v1328
      %v1361 = vadd.f32 %v1293, %v1329
      %v1362 = vadd.f32 %v1294, %v1330
      %v1363 = vadd.f32 %v1295, %v1331
      %v1364 = vadd.f32 %v1296, %v1332
      %v1365 = vadd.f32 %v1297, %v1333
      %v1366 = vadd.f32 %v1298, %v1334
      %v1367 = vadd.f32 %v1299, %v1335
      %v1368 = vadd.f32 %v1300, %v1336
      %v1369 = vadd.f32 %v1301, %v1337
      %v1370 = vadd.f32 %v1302, %v1338
      %v1371 = vadd.f32 %v1303, %v1339
      %v1372 = vadd.f32 %v1304, %v1340
      %v1373 = vadd.f32 %v1305, %v1341
      %v1374 = vadd.f32 %v1306, %v1342
      %v1375 = vadd.f32 %v1307, %v1343
      %v1376 = vadd.f32 %v1308, %v1344
      %v1377 = vadd.f32 %v1309, %v1345
      %v1378 = vadd.f32 %v1310, %v1346
      %v1379 = vlaneseq
      %v1380 = vshrl.u32 %v1379, 7
      %v1381 = vsub.s32 1, %v1380
      %v1382 = vrot.slane %v783, %v1381
      %v1383 = vmul.f32 %v731, %v1382
      %v1384 = vmul.f32 %v732, %v1382
      %v1385 = vmul.f32 %v733, %v1382
      %v1386 = vmul.f32 %v734, %v1382
      %v1387 = vmul.f32 %v735, %v1382
      %v1388 = vmul.f32 %v736, %v1382
      %v1389 = vmul.f32 %v737, %v1382
      %v1390 = vmul.f32 %v738, %v1382
      %v1391 = vmul.f32 %v739, %v1382
      %v1392 = vmul.f32 %v740, %v1382
      %v1393 = vmul.f32 %v741, %v1382
      %v1394 = vmul.f32 %v742, %v1382
      %v1395 = vmul.f32 %v743, %v1382
      %v1396 = vmul.f32 %v744, %v1382
      %v1397 = vmul.f32 %v745, %v1382
      %v1398 = vmul.f32 %v746, %v1382
      %v1399 = vmul.f32 %v747, %v1382
      %v1400 = vmul.f32 %v748, %v1382
      %v1401 = vmul.f32 %v749, %v1382
      %v1402 = vmul.f32 %v750, %v1382
      %v1403 = vmul.f32 %v751, %v1382
      %v1404 = vmul.f32 %v752, %v1382
      %v1405 = vmul.f32 %v753, %v1382
      %v1406 = vmul.f32 %v754, %v1382
      %v1407 = vmul.f32 %v755, %v1382
      %v1408 = vmul.f32 %v756, %v1382
      %v1409 = vmul.f32 %v757, %v1382
      %v1410 = vmul.f32 %v758, %v1382
      %v1411 = vmul.f32 %v759, %v1382
      %v1412 = vmul.f32 %v760, %v1382
      %v1413 = vmul.f32 %v761, %v1382
      %v1414 = vmul.f32 %v762, %v1382
      %v1415 = vmul.f32 %v763, %v1382
      %v1416 = vmul.f32 %v764, %v1382
      %v1417 = vmul.f32 %v765, %v1382
      %v1418 = vmul.f32 %v766, %v1382
      %v1419 = vmul.f32 %v767, %v1382
      %v1420 = vmul.f32 %v768, %v1382
      %v1421 = vmul.f32 %v769, %v1382
      %v1422 = vmul.f32 %v770, %v1382
      %v1423 = vmul.f32 %v771, %v1382
      %v1424 = vmul.f32 %v772, %v1382
      %v1425 = vmul.f32 %v773, %v1382
      %v1426 = vmul.f32 %v774, %v1382
      %v1427 = vmul.f32 %v775, %v1382
      %v1428 = vmul.f32 %v776, %v1382
      %v1429 = vmul.f32 %v777, %v1382
      %v1430 = vmul.f32 %v778, %v1382
      %v1479 = vrot.slane %v1383, 1
      %v1480 = vrot.slane %v1384, 1
      %v1481 = vsel %vm921, %v1479, %v1480
      %v1482 = vrot.slane %v1385, 1
      %v1483 = vsel %vm921, %v1480, %v1482
      %v1484 = vrot.slane %v1386, 1
      %v1485 = vrot.slane %v1387, 1
      %v1486 = vsel %vm921, %v1484, %v1485
      %v1487 = vrot.slane %v1388, 1
      %v1488 = vsel %vm921, %v1485, %v1487
      %v1489 = vrot.slane %v1389, 1
      %v1490 = vrot.slane %v1390, 1
      %v1491 = vsel %vm921, %v1489, %v1490
      %v1492 = vrot.slane %v1391, 1
      %v1493 = vsel %vm921, %v1490, %v1492
      %v1494 = vrot.slane %v1392, 1
      %v1495 = vrot.slane %v1393, 1
      %v1496 = vsel %vm921, %v1494, %v1495
      %v1497 = vrot.slane %v1394, 1
      %v1498 = vsel %vm921, %v1495, %v1497
      %v1499 = vrot.slane %v1395, 1
      %v1500 = vrot.slane %v1396, 1
      %v1501 = vsel %vm921, %v1499, %v1500
      %v1502 = vrot.slane %v1397, 1
      %v1503 = vsel %vm921, %v1500, %v1502
      %v1504 = vrot.slane %v1398, 1
      %v1505 = vrot.slane %v1399, 1
      %v1506 = vsel %vm921, %v1504, %v1505
      %v1507 = vrot.slane %v1400, 1
      %v1508 = vsel %vm921, %v1505, %v1507
      %v1509 = vrot.slane %v1401, 1
      %v1510 = vrot.slane %v1402, 1
      %v1511 = vsel %vm921, %v1509, %v1510
      %v1512 = vrot.slane %v1403, 1
      %v1513 = vsel %vm921, %v1510, %v1512
      %v1514 = vrot.slane %v1404, 1
      %v1515 = vrot.slane %v1405, 1
      %v1516 = vsel %vm921, %v1514, %v1515
      %v1517 = vrot.slane %v1406, 1
      %v1518 = vsel %vm921, %v1515, %v1517
      %v1519 = vrot.slane %v1407, 1
      %v1520 = vrot.slane %v1408, 1
      %v1521 = vsel %vm921, %v1519, %v1520
      %v1522 = vrot.slane %v1409, 1
      %v1523 = vsel %vm921, %v1520, %v1522
      %v1524 = vrot.slane %v1410, 1
      %v1525 = vrot.slane %v1411, 1
      %v1526 = vsel %vm921, %v1524, %v1525
      %v1527 = vrot.slane %v1412, 1
      %v1528 = vsel %vm921, %v1525, %v1527
      %v1529 = vrot.slane %v1413, 1
      %v1530 = vrot.slane %v1414, 1
      %v1531 = vsel %vm921, %v1529, %v1530
      %v1532 = vrot.slane %v1415, 1
      %v1533 = vsel %vm921, %v1530, %v1532
      %v1534 = vrot.slane %v1416, 1
      %v1535 = vrot.slane %v1417, 1
      %v1536 = vsel %vm921, %v1534, %v1535
      %v1537 = vrot.slane %v1418, 1
      %v1538 = vsel %vm921, %v1535, %v1537
      %v1539 = vrot.slane %v1419, 1
      %v1540 = vrot.slane %v1420, 1
      %v1541 = vsel %vm921, %v1539, %v1540
      %v1542 = vrot.slane %v1421, 1
      %v1543 = vsel %vm921, %v1540, %v1542
      %v1544 = vrot.slane %v1422, 1
      %v1545 = vrot.slane %v1423, 1
      %v1546 = vsel %vm921, %v1544, %v1545
      %v1547 = vrot.slane %v1424, 1
      %v1548 = vsel %vm921, %v1545, %v1547
      %v1549 = vrot.slane %v1425, 1
      %v1550 = vrot.slane %v1426, 1
      %v1551 = vsel %vm921, %v1549, %v1550
      %v1552 = vrot.slane %v1427, 1
      %v1553 = vsel %vm921, %v1550, %v1552
      %v1554 = vrot.slane %v1428, 1
      %v1555 = vrot.slane %v1429, 1
      %v1556 = vsel %vm921, %v1554, %v1555
      %v1557 = vrot.slane %v1430, 1
      %v1558 = vsel %vm921, %v1555, %v1557
      %v1591 = vadd.f32 %v1347, %v1481
      %v1592 = vadd.f32 %v1348, %v1483
      %v1593 = vadd.f32 %v1349, %v1486
      %v1594 = vadd.f32 %v1350, %v1488
      %v1595 = vadd.f32 %v1351, %v1491
      %v1596 = vadd.f32 %v1352, %v1493
      %v1597 = vadd.f32 %v1353, %v1496
      %v1598 = vadd.f32 %v1354, %v1498
      %v1599 = vadd.f32 %v1355, %v1501
      %v1600 = vadd.f32 %v1356, %v1503
      %v1601 = vadd.f32 %v1357, %v1506
      %v1602 = vadd.f32 %v1358, %v1508
      %v1603 = vadd.f32 %v1359, %v1511
      %v1604 = vadd.f32 %v1360, %v1513
      %v1605 = vadd.f32 %v1361, %v1516
      %v1606 = vadd.f32 %v1362, %v1518
      %v1607 = vadd.f32 %v1363, %v1521
      %v1608 = vadd.f32 %v1364, %v1523
      %v1609 = vadd.f32 %v1365, %v1526
      %v1610 = vadd.f32 %v1366, %v1528
      %v1611 = vadd.f32 %v1367, %v1531
      %v1612 = vadd.f32 %v1368, %v1533
      %v1613 = vadd.f32 %v1369, %v1536
      %v1614 = vadd.f32 %v1370, %v1538
      %v1615 = vadd.f32 %v1371, %v1541
      %v1616 = vadd.f32 %v1372, %v1543
      %v1617 = vadd.f32 %v1373, %v1546
      %v1618 = vadd.f32 %v1374, %v1548
      %v1619 = vadd.f32 %v1375, %v1551
      %v1620 = vadd.f32 %v1376, %v1553
      %v1621 = vadd.f32 %v1377, %v1556
      %v1622 = vadd.f32 %v1378, %v1558
      %v1623 = vlaneseq
      %v1624 = vshrl.u32 %v1623, 7
      %v1625 = vsub.s32 2, %v1624
      %v1626 = vrot.slane %v783, %v1625
      %v1627 = vmul.f32 %v731, %v1626
      %v1628 = vmul.f32 %v732, %v1626
      %v1629 = vmul.f32 %v733, %v1626
      %v1630 = vmul.f32 %v734, %v1626
      %v1631 = vmul.f32 %v735, %v1626
      %v1632 = vmul.f32 %v736, %v1626
      %v1633 = vmul.f32 %v737, %v1626
      %v1634 = vmul.f32 %v738, %v1626
      %v1635 = vmul.f32 %v739, %v1626
      %v1636 = vmul.f32 %v740, %v1626
      %v1637 = vmul.f32 %v741, %v1626
      %v1638 = vmul.f32 %v742, %v1626
      %v1639 = vmul.f32 %v743, %v1626
      %v1640 = vmul.f32 %v744, %v1626
      %v1641 = vmul.f32 %v745, %v1626
      %v1642 = vmul.f32 %v746, %v1626
      %v1643 = vmul.f32 %v747, %v1626
      %v1644 = vmul.f32 %v748, %v1626
      %v1645 = vmul.f32 %v749, %v1626
      %v1646 = vmul.f32 %v750, %v1626
      %v1647 = vmul.f32 %v751, %v1626
      %v1648 = vmul.f32 %v752, %v1626
      %v1649 = vmul.f32 %v753, %v1626
      %v1650 = vmul.f32 %v754, %v1626
      %v1651 = vmul.f32 %v755, %v1626
      %v1652 = vmul.f32 %v756, %v1626
      %v1653 = vmul.f32 %v757, %v1626
      %v1654 = vmul.f32 %v758, %v1626
      %v1655 = vmul.f32 %v759, %v1626
      %v1656 = vmul.f32 %v760, %v1626
      %v1657 = vmul.f32 %v761, %v1626
      %v1658 = vmul.f32 %v762, %v1626
      %v1659 = vmul.f32 %v763, %v1626
      %v1660 = vmul.f32 %v764, %v1626
      %v1661 = vmul.f32 %v765, %v1626
      %v1662 = vmul.f32 %v766, %v1626
      %v1663 = vmul.f32 %v767, %v1626
      %v1664 = vmul.f32 %v768, %v1626
      %v1665 = vmul.f32 %v769, %v1626
      %v1666 = vmul.f32 %v770, %v1626
      %v1667 = vmul.f32 %v771, %v1626
      %v1668 = vmul.f32 %v772, %v1626
      %v1669 = vmul.f32 %v773, %v1626
      %v1670 = vmul.f32 %v774, %v1626
      %v1671 = vmul.f32 %v775, %v1626
      %v1672 = vmul.f32 %v776, %v1626
      %v1673 = vmul.f32 %v777, %v1626
      %v1674 = vmul.f32 %v778, %v1626
      %v1723 = vrot.slane %v1627, 2
      %v1724 = vrot.slane %v1628, 2
      %v1725 = vsel %vm1166, %v1723, %v1724
      %v1726 = vrot.slane %v1629, 2
      %v1727 = vsel %vm1166, %v1724, %v1726
      %v1728 = vrot.slane %v1630, 2
      %v1729 = vrot.slane %v1631, 2
      %v1730 = vsel %vm1166, %v1728, %v1729
      %v1731 = vrot.slane %v1632, 2
      %v1732 = vsel %vm1166, %v1729, %v1731
      %v1733 = vrot.slane %v1633, 2
      %v1734 = vrot.slane %v1634, 2
      %v1735 = vsel %vm1166, %v1733, %v1734
      %v1736 = vrot.slane %v1635, 2
      %v1737 = vsel %vm1166, %v1734, %v1736
      %v1738 = vrot.slane %v1636, 2
      %v1739 = vrot.slane %v1637, 2
      %v1740 = vsel %vm1166, %v1738, %v1739
      %v1741 = vrot.slane %v1638, 2
      %v1742 = vsel %vm1166, %v1739, %v1741
      %v1743 = vrot.slane %v1639, 2
      %v1744 = vrot.slane %v1640, 2
      %v1745 = vsel %vm1166, %v1743, %v1744
      %v1746 = vrot.slane %v1641, 2
      %v1747 = vsel %vm1166, %v1744, %v1746
      %v1748 = vrot.slane %v1642, 2
      %v1749 = vrot.slane %v1643, 2
      %v1750 = vsel %vm1166, %v1748, %v1749
      %v1751 = vrot.slane %v1644, 2
      %v1752 = vsel %vm1166, %v1749, %v1751
      %v1753 = vrot.slane %v1645, 2
      %v1754 = vrot.slane %v1646, 2
      %v1755 = vsel %vm1166, %v1753, %v1754
      %v1756 = vrot.slane %v1647, 2
      %v1757 = vsel %vm1166, %v1754, %v1756
      %v1758 = vrot.slane %v1648, 2
      %v1759 = vrot.slane %v1649, 2
      %v1760 = vsel %vm1166, %v1758, %v1759
      %v1761 = vrot.slane %v1650, 2
      %v1762 = vsel %vm1166, %v1759, %v1761
      %v1763 = vrot.slane %v1651, 2
      %v1764 = vrot.slane %v1652, 2
      %v1765 = vsel %vm1166, %v1763, %v1764
      %v1766 = vrot.slane %v1653, 2
      %v1767 = vsel %vm1166, %v1764, %v1766
      %v1768 = vrot.slane %v1654, 2
      %v1769 = vrot.slane %v1655, 2
      %v1770 = vsel %vm1166, %v1768, %v1769
      %v1771 = vrot.slane %v1656, 2
      %v1772 = vsel %vm1166, %v1769, %v1771
      %v1773 = vrot.slane %v1657, 2
      %v1774 = vrot.slane %v1658, 2
      %v1775 = vsel %vm1166, %v1773, %v1774
      %v1776 = vrot.slane %v1659, 2
      %v1777 = vsel %vm1166, %v1774, %v1776
      %v1778 = vrot.slane %v1660, 2
      %v1779 = vrot.slane %v1661, 2
      %v1780 = vsel %vm1166, %v1778, %v1779
      %v1781 = vrot.slane %v1662, 2
      %v1782 = vsel %vm1166, %v1779, %v1781
      %v1783 = vrot.slane %v1663, 2
      %v1784 = vrot.slane %v1664, 2
      %v1785 = vsel %vm1166, %v1783, %v1784
      %v1786 = vrot.slane %v1665, 2
      %v1787 = vsel %vm1166, %v1784, %v1786
      %v1788 = vrot.slane %v1666, 2
      %v1789 = vrot.slane %v1667, 2
      %v1790 = vsel %vm1166, %v1788, %v1789
      %v1791 = vrot.slane %v1668, 2
      %v1792 = vsel %vm1166, %v1789, %v1791
      %v1793 = vrot.slane %v1669, 2
      %v1794 = vrot.slane %v1670, 2
      %v1795 = vsel %vm1166, %v1793, %v1794
      %v1796 = vrot.slane %v1671, 2
      %v1797 = vsel %vm1166, %v1794, %v1796
      %v1798 = vrot.slane %v1672, 2
      %v1799 = vrot.slane %v1673, 2
      %v1800 = vsel %vm1166, %v1798, %v1799
      %v1801 = vrot.slane %v1674, 2
      %v1802 = vsel %vm1166, %v1799, %v1801
      %v1835 = vadd.f32 %v1591, %v1725
      %v1836 = vadd.f32 %v1592, %v1727
      %v1837 = vadd.f32 %v1593, %v1730
      %v1838 = vadd.f32 %v1594, %v1732
      %v1839 = vadd.f32 %v1595, %v1735
      %v1840 = vadd.f32 %v1596, %v1737
      %v1841 = vadd.f32 %v1597, %v1740
      %v1842 = vadd.f32 %v1598, %v1742
      %v1843 = vadd.f32 %v1599, %v1745
      %v1844 = vadd.f32 %v1600, %v1747
      %v1845 = vadd.f32 %v1601, %v1750
      %v1846 = vadd.f32 %v1602, %v1752
      %v1847 = vadd.f32 %v1603, %v1755
      %v1848 = vadd.f32 %v1604, %v1757
      %v1849 = vadd.f32 %v1605, %v1760
      %v1850 = vadd.f32 %v1606, %v1762
      %v1851 = vadd.f32 %v1607, %v1765
      %v1852 = vadd.f32 %v1608, %v1767
      %v1853 = vadd.f32 %v1609, %v1770
      %v1854 = vadd.f32 %v1610, %v1772
      %v1855 = vadd.f32 %v1611, %v1775
      %v1856 = vadd.f32 %v1612, %v1777
      %v1857 = vadd.f32 %v1613, %v1780
      %v1858 = vadd.f32 %v1614, %v1782
      %v1859 = vadd.f32 %v1615, %v1785
      %v1860 = vadd.f32 %v1616, %v1787
      %v1861 = vadd.f32 %v1617, %v1790
      %v1862 = vadd.f32 %v1618, %v1792
      %v1863 = vadd.f32 %v1619, %v1795
      %v1864 = vadd.f32 %v1620, %v1797
      %v1865 = vadd.f32 %v1621, %v1800
      %v1866 = vadd.f32 %v1622, %v1802
      %v1867 = vlaneseq
      %v1868 = vshrl.u32 %v1867, 7
      %v1869 = vsub.s32 0, %v1868
      %v1870 = vrot.slane %v784, %v1869
      %v1871 = vmul.f32 %v734, %v1870
      %v1872 = vmul.f32 %v735, %v1870
      %v1873 = vmul.f32 %v737, %v1870
      %v1874 = vmul.f32 %v738, %v1870
      %v1875 = vmul.f32 %v740, %v1870
      %v1876 = vmul.f32 %v741, %v1870
      %v1877 = vmul.f32 %v743, %v1870
      %v1878 = vmul.f32 %v744, %v1870
      %v1879 = vmul.f32 %v746, %v1870
      %v1880 = vmul.f32 %v747, %v1870
      %v1881 = vmul.f32 %v749, %v1870
      %v1882 = vmul.f32 %v750, %v1870
      %v1883 = vmul.f32 %v752, %v1870
      %v1884 = vmul.f32 %v753, %v1870
      %v1885 = vmul.f32 %v755, %v1870
      %v1886 = vmul.f32 %v756, %v1870
      %v1887 = vmul.f32 %v758, %v1870
      %v1888 = vmul.f32 %v759, %v1870
      %v1889 = vmul.f32 %v761, %v1870
      %v1890 = vmul.f32 %v762, %v1870
      %v1891 = vmul.f32 %v764, %v1870
      %v1892 = vmul.f32 %v765, %v1870
      %v1893 = vmul.f32 %v767, %v1870
      %v1894 = vmul.f32 %v768, %v1870
      %v1895 = vmul.f32 %v770, %v1870
      %v1896 = vmul.f32 %v771, %v1870
      %v1897 = vmul.f32 %v773, %v1870
      %v1898 = vmul.f32 %v774, %v1870
      %v1899 = vmul.f32 %v776, %v1870
      %v1900 = vmul.f32 %v777, %v1870
      %v1901 = vmul.f32 %v779, %v1870
      %v1902 = vmul.f32 %v780, %v1870
      %v1903 = vadd.f32 %v1835, %v1871
      %v1904 = vadd.f32 %v1836, %v1872
      %v1905 = vadd.f32 %v1837, %v1873
      %v1906 = vadd.f32 %v1838, %v1874
      %v1907 = vadd.f32 %v1839, %v1875
      %v1908 = vadd.f32 %v1840, %v1876
      %v1909 = vadd.f32 %v1841, %v1877
      %v1910 = vadd.f32 %v1842, %v1878
      %v1911 = vadd.f32 %v1843, %v1879
      %v1912 = vadd.f32 %v1844, %v1880
      %v1913 = vadd.f32 %v1845, %v1881
      %v1914 = vadd.f32 %v1846, %v1882
      %v1915 = vadd.f32 %v1847, %v1883
      %v1916 = vadd.f32 %v1848, %v1884
      %v1917 = vadd.f32 %v1849, %v1885
      %v1918 = vadd.f32 %v1850, %v1886
      %v1919 = vadd.f32 %v1851, %v1887
      %v1920 = vadd.f32 %v1852, %v1888
      %v1921 = vadd.f32 %v1853, %v1889
      %v1922 = vadd.f32 %v1854, %v1890
      %v1923 = vadd.f32 %v1855, %v1891
      %v1924 = vadd.f32 %v1856, %v1892
      %v1925 = vadd.f32 %v1857, %v1893
      %v1926 = vadd.f32 %v1858, %v1894
      %v1927 = vadd.f32 %v1859, %v1895
      %v1928 = vadd.f32 %v1860, %v1896
      %v1929 = vadd.f32 %v1861, %v1897
      %v1930 = vadd.f32 %v1862, %v1898
      %v1931 = vadd.f32 %v1863, %v1899
      %v1932 = vadd.f32 %v1864, %v1900
      %v1933 = vadd.f32 %v1865, %v1901
      %v1934 = vadd.f32 %v1866, %v1902
      %v1935 = vlaneseq
      %v1936 = vshrl.u32 %v1935, 7
      %v1937 = vsub.s32 1, %v1936
      %v1938 = vrot.slane %v784, %v1937
      %v1939 = vmul.f32 %v734, %v1938
      %v1940 = vmul.f32 %v735, %v1938
      %v1941 = vmul.f32 %v736, %v1938
      %v1942 = vmul.f32 %v737, %v1938
      %v1943 = vmul.f32 %v738, %v1938
      %v1944 = vmul.f32 %v739, %v1938
      %v1945 = vmul.f32 %v740, %v1938
      %v1946 = vmul.f32 %v741, %v1938
      %v1947 = vmul.f32 %v742, %v1938
      %v1948 = vmul.f32 %v743, %v1938
      %v1949 = vmul.f32 %v744, %v1938
      %v1950 = vmul.f32 %v745, %v1938
      %v1951 = vmul.f32 %v746, %v1938
      %v1952 = vmul.f32 %v747, %v1938
      %v1953 = vmul.f32 %v748, %v1938
      %v1954 = vmul.f32 %v749, %v1938
      %v1955 = vmul.f32 %v750, %v1938
      %v1956 = vmul.f32 %v751, %v1938
      %v1957 = vmul.f32 %v752, %v1938
      %v1958 = vmul.f32 %v753, %v1938
      %v1959 = vmul.f32 %v754, %v1938
      %v1960 = vmul.f32 %v755, %v1938
      %v1961 = vmul.f32 %v756, %v1938
      %v1962 = vmul.f32 %v757, %v1938
      %v1963 = vmul.f32 %v758, %v1938
      %v1964 = vmul.f32 %v759, %v1938
      %v1965 = vmul.f32 %v760, %v1938
      %v1966 = vmul.f32 %v761, %v1938
      %v1967 = vmul.f32 %v762, %v1938
      %v1968 = vmul.f32 %v763, %v1938
      %v1969 = vmul.f32 %v764, %v1938
      %v1970 = vmul.f32 %v765, %v1938
      %v1971 = vmul.f32 %v766, %v1938
      %v1972 = vmul.f32 %v767, %v1938
      %v1973 = vmul.f32 %v768, %v1938
      %v1974 = vmul.f32 %v769, %v1938
      %v1975 = vmul.f32 %v770, %v1938
      %v1976 = vmul.f32 %v771, %v1938
      %v1977 = vmul.f32 %v772, %v1938
      %v1978 = vmul.f32 %v773, %v1938
      %v1979 = vmul.f32 %v774, %v1938
      %v1980 = vmul.f32 %v775, %v1938
      %v1981 = vmul.f32 %v776, %v1938
      %v1982 = vmul.f32 %v777, %v1938
      %v1983 = vmul.f32 %v778, %v1938
      %v1984 = vmul.f32 %v779, %v1938
      %v1985 = vmul.f32 %v780, %v1938
      %v1986 = vmul.f32 %v781, %v1938
      %v2035 = vrot.slane %v1939, 1
      %v2036 = vrot.slane %v1940, 1
      %v2037 = vsel %vm921, %v2035, %v2036
      %v2038 = vrot.slane %v1941, 1
      %v2039 = vsel %vm921, %v2036, %v2038
      %v2040 = vrot.slane %v1942, 1
      %v2041 = vrot.slane %v1943, 1
      %v2042 = vsel %vm921, %v2040, %v2041
      %v2043 = vrot.slane %v1944, 1
      %v2044 = vsel %vm921, %v2041, %v2043
      %v2045 = vrot.slane %v1945, 1
      %v2046 = vrot.slane %v1946, 1
      %v2047 = vsel %vm921, %v2045, %v2046
      %v2048 = vrot.slane %v1947, 1
      %v2049 = vsel %vm921, %v2046, %v2048
      %v2050 = vrot.slane %v1948, 1
      %v2051 = vrot.slane %v1949, 1
      %v2052 = vsel %vm921, %v2050, %v2051
      %v2053 = vrot.slane %v1950, 1
      %v2054 = vsel %vm921, %v2051, %v2053
      %v2055 = vrot.slane %v1951, 1
      %v2056 = vrot.slane %v1952, 1
      %v2057 = vsel %vm921, %v2055, %v2056
      %v2058 = vrot.slane %v1953, 1
      %v2059 = vsel %vm921, %v2056, %v2058
      %v2060 = vrot.slane %v1954, 1
      %v2061 = vrot.slane %v1955, 1
      %v2062 = vsel %vm921, %v2060, %v2061
      %v2063 = vrot.slane %v1956, 1
      %v2064 = vsel %vm921, %v2061, %v2063
      %v2065 = vrot.slane %v1957, 1
      %v2066 = vrot.slane %v1958, 1
      %v2067 = vsel %vm921, %v2065, %v2066
      %v2068 = vrot.slane %v1959, 1
      %v2069 = vsel %vm921, %v2066, %v2068
      %v2070 = vrot.slane %v1960, 1
      %v2071 = vrot.slane %v1961, 1
      %v2072 = vsel %vm921, %v2070, %v2071
      %v2073 = vrot.slane %v1962, 1
      %v2074 = vsel %vm921, %v2071, %v2073
      %v2075 = vrot.slane %v1963, 1
      %v2076 = vrot.slane %v1964, 1
      %v2077 = vsel %vm921, %v2075, %v2076
      %v2078 = vrot.slane %v1965, 1
      %v2079 = vsel %vm921, %v2076, %v2078
      %v2080 = vrot.slane %v1966, 1
      %v2081 = vrot.slane %v1967, 1
      %v2082 = vsel %vm921, %v2080, %v2081
      %v2083 = vrot.slane %v1968, 1
      %v2084 = vsel %vm921, %v2081, %v2083
      %v2085 = vrot.slane %v1969, 1
      %v2086 = vrot.slane %v1970, 1
      %v2087 = vsel %vm921, %v2085, %v2086
      %v2088 = vrot.slane %v1971, 1
      %v2089 = vsel %vm921, %v2086, %v2088
      %v2090 = vrot.slane %v1972, 1
      %v2091 = vrot.slane %v1973, 1
      %v2092 = vsel %vm921, %v2090, %v2091
      %v2093 = vrot.slane %v1974, 1
      %v2094 = vsel %vm921, %v2091, %v2093
      %v2095 = vrot.slane %v1975, 1
      %v2096 = vrot.slane %v1976, 1
      %v2097 = vsel %vm921, %v2095, %v2096
      %v2098 = vrot.slane %v1977, 1
      %v2099 = vsel %vm921, %v2096, %v2098
      %v2100 = vrot.slane %v1978, 1
      %v2101 = vrot.slane %v1979, 1
      %v2102 = vsel %vm921, %v2100, %v2101
      %v2103 = vrot.slane %v1980, 1
      %v2104 = vsel %vm921, %v2101, %v2103
      %v2105 = vrot.slane %v1981, 1
      %v2106 = vrot.slane %v1982, 1
      %v2107 = vsel %vm921, %v2105, %v2106
      %v2108 = vrot.slane %v1983, 1
      %v2109 = vsel %vm921, %v2106, %v2108
      %v2110 = vrot.slane %v1984, 1
      %v2111 = vrot.slane %v1985, 1
      %v2112 = vsel %vm921, %v2110, %v2111
      %v2113 = vrot.slane %v1986, 1
      %v2114 = vsel %vm921, %v2111, %v2113
      %v2147 = vadd.f32 %v1903, %v2037
      %v2148 = vadd.f32 %v1904, %v2039
      %v2149 = vadd.f32 %v1905, %v2042
      %v2150 = vadd.f32 %v1906, %v2044
      %v2151 = vadd.f32 %v1907, %v2047
      %v2152 = vadd.f32 %v1908, %v2049
      %v2153 = vadd.f32 %v1909, %v2052
      %v2154 = vadd.f32 %v1910, %v2054
      %v2155 = vadd.f32 %v1911, %v2057
      %v2156 = vadd.f32 %v1912, %v2059
      %v2157 = vadd.f32 %v1913, %v2062
      %v2158 = vadd.f32 %v1914, %v2064
      %v2159 = vadd.f32 %v1915, %v2067
      %v2160 = vadd.f32 %v1916, %v2069
      %v2161 = vadd.f32 %v1917, %v2072
      %v2162 = vadd.f32 %v1918, %v2074
      %v2163 = vadd.f32 %v1919, %v2077
      %v2164 = vadd.f32 %v1920, %v2079
      %v2165 = vadd.f32 %v1921, %v2082
      %v2166 = vadd.f32 %v1922, %v2084
      %v2167 = vadd.f32 %v1923, %v2087
      %v2168 = vadd.f32 %v1924, %v2089
      %v2169 = vadd.f32 %v1925, %v2092
      %v2170 = vadd.f32 %v1926, %v2094
      %v2171 = vadd.f32 %v1927, %v2097
      %v2172 = vadd.f32 %v1928, %v2099
      %v2173 = vadd.f32 %v1929, %v2102
      %v2174 = vadd.f32 %v1930, %v2104
      %v2175 = vadd.f32 %v1931, %v2107
      %v2176 = vadd.f32 %v1932, %v2109
      %v2177 = vadd.f32 %v1933, %v2112
      %v2178 = vadd.f32 %v1934, %v2114
      %v2179 = vlaneseq
      %v2180 = vshrl.u32 %v2179, 7
      %v2181 = vsub.s32 2, %v2180
      %v2182 = vrot.slane %v784, %v2181
      %v2183 = vmul.f32 %v734, %v2182
      %v2184 = vmul.f32 %v735, %v2182
      %v2185 = vmul.f32 %v736, %v2182
      %v2186 = vmul.f32 %v737, %v2182
      %v2187 = vmul.f32 %v738, %v2182
      %v2188 = vmul.f32 %v739, %v2182
      %v2189 = vmul.f32 %v740, %v2182
      %v2190 = vmul.f32 %v741, %v2182
      %v2191 = vmul.f32 %v742, %v2182
      %v2192 = vmul.f32 %v743, %v2182
      %v2193 = vmul.f32 %v744, %v2182
      %v2194 = vmul.f32 %v745, %v2182
      %v2195 = vmul.f32 %v746, %v2182
      %v2196 = vmul.f32 %v747, %v2182
      %v2197 = vmul.f32 %v748, %v2182
      %v2198 = vmul.f32 %v749, %v2182
      %v2199 = vmul.f32 %v750, %v2182
      %v2200 = vmul.f32 %v751, %v2182
      %v2201 = vmul.f32 %v752, %v2182
      %v2202 = vmul.f32 %v753, %v2182
      %v2203 = vmul.f32 %v754, %v2182
      %v2204 = vmul.f32 %v755, %v2182
      %v2205 = vmul.f32 %v756, %v2182
      %v2206 = vmul.f32 %v757, %v2182
      %v2207 = vmul.f32 %v758, %v2182
      %v2208 = vmul.f32 %v759, %v2182
      %v2209 = vmul.f32 %v760, %v2182
      %v2210 = vmul.f32 %v761, %v2182
      %v2211 = vmul.f32 %v762, %v2182
      %v2212 = vmul.f32 %v763, %v2182
      %v2213 = vmul.f32 %v764, %v2182
      %v2214 = vmul.f32 %v765, %v2182
      %v2215 = vmul.f32 %v766, %v2182
      %v2216 = vmul.f32 %v767, %v2182
      %v2217 = vmul.f32 %v768, %v2182
      %v2218 = vmul.f32 %v769, %v2182
      %v2219 = vmul.f32 %v770, %v2182
      %v2220 = vmul.f32 %v771, %v2182
      %v2221 = vmul.f32 %v772, %v2182
      %v2222 = vmul.f32 %v773, %v2182
      %v2223 = vmul.f32 %v774, %v2182
      %v2224 = vmul.f32 %v775, %v2182
      %v2225 = vmul.f32 %v776, %v2182
      %v2226 = vmul.f32 %v777, %v2182
      %v2227 = vmul.f32 %v778, %v2182
      %v2228 = vmul.f32 %v779, %v2182
      %v2229 = vmul.f32 %v780, %v2182
      %v2230 = vmul.f32 %v781, %v2182
      %v2279 = vrot.slane %v2183, 2
      %v2280 = vrot.slane %v2184, 2
      %v2281 = vsel %vm1166, %v2279, %v2280
      %v2282 = vrot.slane %v2185, 2
      %v2283 = vsel %vm1166, %v2280, %v2282
      %v2284 = vrot.slane %v2186, 2
      %v2285 = vrot.slane %v2187, 2
      %v2286 = vsel %vm1166, %v2284, %v2285
      %v2287 = vrot.slane %v2188, 2
      %v2288 = vsel %vm1166, %v2285, %v2287
      %v2289 = vrot.slane %v2189, 2
      %v2290 = vrot.slane %v2190, 2
      %v2291 = vsel %vm1166, %v2289, %v2290
      %v2292 = vrot.slane %v2191, 2
      %v2293 = vsel %vm1166, %v2290, %v2292
      %v2294 = vrot.slane %v2192, 2
      %v2295 = vrot.slane %v2193, 2
      %v2296 = vsel %vm1166, %v2294, %v2295
      %v2297 = vrot.slane %v2194, 2
      %v2298 = vsel %vm1166, %v2295, %v2297
      %v2299 = vrot.slane %v2195, 2
      %v2300 = vrot.slane %v2196, 2
      %v2301 = vsel %vm1166, %v2299, %v2300
      %v2302 = vrot.slane %v2197, 2
      %v2303 = vsel %vm1166, %v2300, %v2302
      %v2304 = vrot.slane %v2198, 2
      %v2305 = vrot.slane %v2199, 2
      %v2306 = vsel %vm1166, %v2304, %v2305
      %v2307 = vrot.slane %v2200, 2
      %v2308 = vsel %vm1166, %v2305, %v2307
      %v2309 = vrot.slane %v2201, 2
      %v2310 = vrot.slane %v2202, 2
      %v2311 = vsel %vm1166, %v2309, %v2310
      %v2312 = vrot.slane %v2203, 2
      %v2313 = vsel %vm1166, %v2310, %v2312
      %v2314 = vrot.slane %v2204, 2
      %v2315 = vrot.slane %v2205, 2
      %v2316 = vsel %vm1166, %v2314, %v2315
      %v2317 = vrot.slane %v2206, 2
      %v2318 = vsel %vm1166, %v2315, %v2317
      %v2319 = vrot.slane %v2207, 2
      %v2320 = vrot.slane %v2208, 2
      %v2321 = vsel %vm1166, %v2319, %v2320
      %v2322 = vrot.slane %v2209, 2
      %v2323 = vsel %vm1166, %v2320, %v2322
      %v2324 = vrot.slane %v2210, 2
      %v2325 = vrot.slane %v2211, 2
      %v2326 = vsel %vm1166, %v2324, %v2325
      %v2327 = vrot.slane %v2212, 2
      %v2328 = vsel %vm1166, %v2325, %v2327
      %v2329 = vrot.slane %v2213, 2
      %v2330 = vrot.slane %v2214, 2
      %v2331 = vsel %vm1166, %v2329, %v2330
      %v2332 = vrot.slane %v2215, 2
      %v2333 = vsel %vm1166, %v2330, %v2332
      %v2334 = vrot.slane %v2216, 2
      %v2335 = vrot.slane %v2217, 2
      %v2336 = vsel %vm1166, %v2334, %v2335
      %v2337 = vrot.slane %v2218, 2
      %v2338 = vsel %vm1166, %v2335, %v2337
      %v2339 = vrot.slane %v2219, 2
      %v2340 = vrot.slane %v2220, 2
      %v2341 = vsel %vm1166, %v2339, %v2340
      %v2342 = vrot.slane %v2221, 2
      %v2343 = vsel %vm1166, %v2340, %v2342
      %v2344 = vrot.slane %v2222, 2
      %v2345 = vrot.slane %v2223, 2
      %v2346 = vsel %vm1166, %v2344, %v2345
      %v2347 = vrot.slane %v2224, 2
      %v2348 = vsel %vm1166, %v2345, %v2347
      %v2349 = vrot.slane %v2225, 2
      %v2350 = vrot.slane %v2226, 2
      %v2351 = vsel %vm1166, %v2349, %v2350
      %v2352 = vrot.slane %v2227, 2
      %v2353 = vsel %vm1166, %v2350, %v2352
      %v2354 = vrot.slane %v2228, 2
      %v2355 = vrot.slane %v2229, 2
      %v2356 = vsel %vm1166, %v2354, %v2355
      %v2357 = vrot.slane %v2230, 2
      %v2358 = vsel %vm1166, %v2355, %v2357
      %v2391 = vadd.f32 %v2147, %v2281
      %v2392 = vadd.f32 %v2148, %v2283
      %v2393 = vadd.f32 %v2149, %v2286
      %v2394 = vadd.f32 %v2150, %v2288
      %v2395 = vadd.f32 %v2151, %v2291
      %v2396 = vadd.f32 %v2152, %v2293
      %v2397 = vadd.f32 %v2153, %v2296
      %v2398 = vadd.f32 %v2154, %v2298
      %v2399 = vadd.f32 %v2155, %v2301
      %v2400 = vadd.f32 %v2156, %v2303
      %v2401 = vadd.f32 %v2157, %v2306
      %v2402 = vadd.f32 %v2158, %v2308
      %v2403 = vadd.f32 %v2159, %v2311
      %v2404 = vadd.f32 %v2160, %v2313
      %v2405 = vadd.f32 %v2161, %v2316
      %v2406 = vadd.f32 %v2162, %v2318
      %v2407 = vadd.f32 %v2163, %v2321
      %v2408 = vadd.f32 %v2164, %v2323
      %v2409 = vadd.f32 %v2165, %v2326
      %v2410 = vadd.f32 %v2166, %v2328
      %v2411 = vadd.f32 %v2167, %v2331
      %v2412 = vadd.f32 %v2168, %v2333
      %v2413 = vadd.f32 %v2169, %v2336
      %v2414 = vadd.f32 %v2170, %v2338
      %v2415 = vadd.f32 %v2171, %v2341
      %v2416 = vadd.f32 %v2172, %v2343
      %v2417 = vadd.f32 %v2173, %v2346
      %v2418 = vadd.f32 %v2174, %v2348
      %v2419 = vadd.f32 %v2175, %v2351
      %v2420 = vadd.f32 %v2176, %v2353
      %v2421 = vadd.f32 %v2177, %v2356
      %v2422 = vadd.f32 %v2178, %v2358
      %v2423 = vld [vmem:[%s4] sm:$0x3]
      %v2424 = vld [vmem:[%s5] sm:$0x1]
      %v2426 = vlaneseq
      %v2427 = vshrl.u32 %v2426, 7
      %v2428 = vsub.s32 0, %v2427
      %v2429 = vrot.slane %v2424, %v2428
      %v2432 = vsel %vm292, %v2391, 0
      %v2435 = vsel %vm292, %v2392, 0
      %v2438 = vsel %vm292, %v2393, 0
      %v2441 = vsel %vm292, %v2394, 0
      %v2444 = vsel %vm292, %v2395, 0
      %v2447 = vsel %vm292, %v2396, 0
      %v2450 = vsel %vm292, %v2397, 0
      %v2453 = vsel %vm292, %v2398, 0
      %v2456 = vsel %vm292, %v2399, 0
      %v2459 = vsel %vm292, %v2400, 0
      %v2462 = vsel %vm292, %v2401, 0
      %v2465 = vsel %vm292, %v2402, 0
      %v2468 = vsel %vm292, %v2403, 0
      %v2471 = vsel %vm292, %v2404, 0
      %v2474 = vsel %vm292, %v2405, 0
      %v2477 = vsel %vm292, %v2406, 0
      %v2480 = vsel %vm292, %v2407, 0
      %v2483 = vsel %vm292, %v2408, 0
      %v2486 = vsel %vm292, %v2409, 0
      %v2489 = vsel %vm292, %v2410, 0
      %v2492 = vsel %vm292, %v2411, 0
      %v2495 = vsel %vm292, %v2412, 0
      %v2498 = vsel %vm292, %v2413, 0
      %v2501 = vsel %vm292, %v2414, 0
      %v2504 = vsel %vm292, %v2415, 0
      %v2507 = vsel %vm292, %v2416, 0
      %v2510 = vsel %vm292, %v2417, 0
      %v2513 = vsel %vm292, %v2418, 0
      %v2516 = vsel %vm292, %v2419, 0
      %v2519 = vsel %vm292, %v2420, 0
      %v2522 = vsel %vm292, %v2421, 0
      %v2525 = vsel %vm292, %v2422, 0
      %v2528 = vsel %vm389, %v2423, 0
      %2530 = vmatprep.subr.mxu0 0.0
      %2531 = vmatpush1.msra.mxu0 %v2528
      %2532 = vmatprep.subr.mxu0 0.0
      %2533 = vmatpush1.msra.mxu0 0.0
      %2534 = vmatprep.subr.mxu0 0.0
      %2535 = vmatpush1.msra.mxu0 0.0
      %2536 = vmatprep.subr.mxu0 0.0
      %2537 = vmatpush1.msra.mxu0 0.0
      %2538 = vmatprep.subr.mxu0 0.0
      %2539 = vmatpush1.msra.mxu0 0.0
      %2540 = vmatprep.subr.mxu0 0.0
      %2541 = vmatpush1.msra.mxu0 0.0
      %2542 = vmatprep.subr.mxu0 0.0
      %2543 = vmatpush1.msra.mxu0 0.0
      %2544 = vmatprep.subr.mxu0 0.0
      %2545 = vmatpush1.msra.mxu0 0.0
      %2546 = vmatprep.subr.mxu0 0.0
      %2547 = vmatpush1.msra.mxu0 0.0
      %2548 = vmatprep.subr.mxu0 0.0
      %2549 = vmatpush1.msra.mxu0 0.0
      %2550 = vmatprep.subr.mxu0 0.0
      %2551 = vmatpush1.msra.mxu0 0.0
      %2552 = vmatprep.subr.mxu0 0.0
      %2553 = vmatpush1.msra.mxu0 0.0
      %2554 = vmatprep.subr.mxu0 0.0
      %2555 = vmatpush1.msra.mxu0 0.0
      %2556 = vmatprep.subr.mxu0 0.0
      %2557 = vmatpush1.msra.mxu0 0.0
      %2558 = vmatprep.subr.mxu0 0.0
      %2559 = vmatpush1.msra.mxu0 0.0
      %2560 = vmatprep.subr.mxu0 0.0
      %2561 = vmatpush1.msra.mxu0 0.0
      %2562 = vmatprep.subr.mxu0 0.0
      %2563 = vmatpush1.msra.mxu0 0.0
      %2564 = vmatprep.subr.mxu0 0.0
      %2565 = vmatpush1.msra.mxu0 0.0
      %2566 = vmatprep.subr.mxu0 0.0
      %2567 = vmatpush1.msra.mxu0 0.0
      %2568 = vmatprep.subr.mxu0 0.0
      %2569 = vmatpush1.msra.mxu0 0.0
      %2570 = vmatprep.subr.mxu0 0.0
      %2571 = vmatpush1.msra.mxu0 0.0
      %2572 = vmatprep.subr.mxu0 0.0
      %2573 = vmatpush1.msra.mxu0 0.0
      %2574 = vmatprep.subr.mxu0 0.0
      %2575 = vmatpush1.msra.mxu0 0.0
      %2576 = vmatprep.subr.mxu0 0.0
      %2577 = vmatpush1.msra.mxu0 0.0
      %2578 = vmatprep.subr.mxu0 0.0
      %2579 = vmatpush1.msra.mxu0 0.0
      %2580 = vmatprep.subr.mxu0 0.0
      %2581 = vmatpush1.msra.mxu0 0.0
      %2582 = vmatprep.subr.mxu0 0.0
      %2583 = vmatpush1.msra.mxu0 0.0
      %2584 = vmatprep.subr.mxu0 0.0
      %2585 = vmatpush1.msra.mxu0 0.0
      %2586 = vmatprep.subr.mxu0 0.0
      %2587 = vmatpush1.msra.mxu0 0.0
      %2588 = vmatprep.subr.mxu0 0.0
      %2589 = vmatpush1.msra.mxu0 0.0
      %2590 = vmatprep.subr.mxu0 0.0
      %2591 = vmatpush1.msra.mxu0 0.0
      %2592 = vmatprep.subr.mxu0 0.0
      %2593 = vmatpush1.msra.mxu0 0.0
      %2594 = vmatprep.mubr.f32.mxu0 0.0
      %2595 = vmatmul.mubr.f32.gmra.mrb[0].mxu0 %v2432
      %v2596 = vpop.f32.mrb[0].mxu0
      %v2597 = vadd.f32 %v2429, %v2596
      %v2598 = vpop.f32.mrb[0].mxu0
      %2599 = vmatprep.mubr.f32.mxu0 0.0
      %2600 = vmatmul.mubr.f32.gmra.mrb[0].mxu0 %v2435
      %v2601 = vpop.f32.mrb[0].mxu0
      %v2602 = vadd.f32 %v2429, %v2601
      %v2603 = vpop.f32.mrb[0].mxu0
      %2604 = vmatprep.mubr.f32.mxu0 0.0
      %2605 = vmatmul.mubr.f32.gmra.mrb[0].mxu0 %v2438
      %v2606 = vpop.f32.mrb[0].mxu0
      %v2607 = vadd.f32 %v2429, %v2606
      %v2608 = vpop.f32.mrb[0].mxu0
      %2609 = vmatprep.mubr.f32.mxu0 0.0
      %2610 = vmatmul.mubr.f32.gmra.mrb[0].mxu0 %v2441
      %v2611 = vpop.f32.mrb[0].mxu0
      %v2612 = vadd.f32 %v2429, %v2611
      %v2613 = vpop.f32.mrb[0].mxu0
      %2614 = vmatprep.mubr.f32.mxu0 0.0
      %2615 = vmatmul.mubr.f32.gmra.mrb[0].mxu0 %v2444
      %v2616 = vpop.f32.mrb[0].mxu0
      %v2617 = vadd.f32 %v2429, %v2616
      %v2618 = vpop.f32.mrb[0].mxu0
      %2619 = vmatprep.mubr.f32.mxu0 0.0
      %2620 = vmatmul.mubr.f32.gmra.mrb[0].mxu0 %v2447
      %v2621 = vpop.f32.mrb[0].mxu0
      %v2622 = vadd.f32 %v2429, %v2621
      %v2623 = vpop.f32.mrb[0].mxu0
      %2624 = vmatprep.mubr.f32.mxu0 0.0
      %2625 = vmatmul.mubr.f32.gmra.mrb[0].mxu0 %v2450
      %v2626 = vpop.f32.mrb[0].mxu0
      %v2627 = vadd.f32 %v2429, %v2626
      %v2628 = vpop.f32.mrb[0].mxu0
      %2629 = vmatprep.mubr.f32.mxu0 0.0
      %2630 = vmatmul.mubr.f32.gmra.mrb[0].mxu0 %v2453
      %v2631 = vpop.f32.mrb[0].mxu0
      %v2632 = vadd.f32 %v2429, %v2631
      %v2633 = vpop.f32.mrb[0].mxu0
      %2634 = vmatprep.mubr.f32.mxu0 0.0
      %2635 = vmatmul.mubr.f32.gmra.mrb[0].mxu0 %v2456
      %v2636 = vpop.f32.mrb[0].mxu0
      %v2637 = vadd.f32 %v2429, %v2636
      %v2638 = vpop.f32.mrb[0].mxu0
      %2639 = vmatprep.mubr.f32.mxu0 0.0
      %2640 = vmatmul.mubr.f32.gmra.mrb[0].mxu0 %v2459
      %v2641 = vpop.f32.mrb[0].mxu0
      %v2642 = vadd.f32 %v2429, %v2641
      %v2643 = vpop.f32.mrb[0].mxu0
      %2644 = vmatprep.mubr.f32.mxu0 0.0
      %2645 = vmatmul.mubr.f32.gmra.mrb[0].mxu0 %v2462
      %v2646 = vpop.f32.mrb[0].mxu0
      %v2647 = vadd.f32 %v2429, %v2646
      %v2648 = vpop.f32.mrb[0].mxu0
      %2649 = vmatprep.mubr.f32.mxu0 0.0
      %2650 = vmatmul.mubr.f32.gmra.mrb[0].mxu0 %v2465
      %v2651 = vpop.f32.mrb[0].mxu0
      %v2652 = vadd.f32 %v2429, %v2651
      %v2653 = vpop.f32.mrb[0].mxu0
      %2654 = vmatprep.mubr.f32.mxu0 0.0
      %2655 = vmatmul.mubr.f32.gmra.mrb[0].mxu0 %v2468
      %v2656 = vpop.f32.mrb[0].mxu0
      %v2657 = vadd.f32 %v2429, %v2656
      %v2658 = vpop.f32.mrb[0].mxu0
      %2659 = vmatprep.mubr.f32.mxu0 0.0
      %2660 = vmatmul.mubr.f32.gmra.mrb[0].mxu0 %v2471
      %v2661 = vpop.f32.mrb[0].mxu0
      %v2662 = vadd.f32 %v2429, %v2661
      %v2663 = vpop.f32.mrb[0].mxu0
      %2664 = vmatprep.mubr.f32.mxu0 0.0
      %2665 = vmatmul.mubr.f32.gmra.mrb[0].mxu0 %v2474
      %v2666 = vpop.f32.mrb[0].mxu0
      %v2667 = vadd.f32 %v2429, %v2666
      %v2668 = vpop.f32.mrb[0].mxu0
      %2669 = vmatprep.mubr.f32.mxu0 0.0
      %2670 = vmatmul.mubr.f32.gmra.mrb[0].mxu0 %v2477
      %v2671 = vpop.f32.mrb[0].mxu0
      %v2672 = vadd.f32 %v2429, %v2671
      %v2673 = vpop.f32.mrb[0].mxu0
      %2674 = vmatprep.mubr.f32.mxu0 0.0
      %2675 = vmatmul.mubr.f32.gmra.mrb[0].mxu0 %v2480
      %v2676 = vpop.f32.mrb[0].mxu0
      %v2677 = vadd.f32 %v2429, %v2676
      %v2678 = vpop.f32.mrb[0].mxu0
      %2679 = vmatprep.mubr.f32.mxu0 0.0
      %2680 = vmatmul.mubr.f32.gmra.mrb[0].mxu0 %v2483
      %v2681 = vpop.f32.mrb[0].mxu0
      %v2682 = vadd.f32 %v2429, %v2681
      %v2683 = vpop.f32.mrb[0].mxu0
      %2684 = vmatprep.mubr.f32.mxu0 0.0
      %2685 = vmatmul.mubr.f32.gmra.mrb[0].mxu0 %v2486
      %v2686 = vpop.f32.mrb[0].mxu0
      %v2687 = vadd.f32 %v2429, %v2686
      %v2688 = vpop.f32.mrb[0].mxu0
      %2689 = vmatprep.mubr.f32.mxu0 0.0
      %2690 = vmatmul.mubr.f32.gmra.mrb[0].mxu0 %v2489
      %v2691 = vpop.f32.mrb[0].mxu0
      %v2692 = vadd.f32 %v2429, %v2691
      %v2693 = vpop.f32.mrb[0].mxu0
      %2694 = vmatprep.mubr.f32.mxu0 0.0
      %2695 = vmatmul.mubr.f32.gmra.mrb[0].mxu0 %v2492
      %v2696 = vpop.f32.mrb[0].mxu0
      %v2697 = vadd.f32 %v2429, %v2696
      %v2698 = vpop.f32.mrb[0].mxu0
      %2699 = vmatprep.mubr.f32.mxu0 0.0
      %2700 = vmatmul.mubr.f32.gmra.mrb[0].mxu0 %v2495
      %v2701 = vpop.f32.mrb[0].mxu0
      %v2702 = vadd.f32 %v2429, %v2701
      %v2703 = vpop.f32.mrb[0].mxu0
      %2704 = vmatprep.mubr.f32.mxu0 0.0
      %2705 = vmatmul.mubr.f32.gmra.mrb[0].mxu0 %v2498
      %v2706 = vpop.f32.mrb[0].mxu0
      %v2707 = vadd.f32 %v2429, %v2706
      %v2708 = vpop.f32.mrb[0].mxu0
      %2709 = vmatprep.mubr.f32.mxu0 0.0
      %2710 = vmatmul.mubr.f32.gmra.mrb[0].mxu0 %v2501
      %v2711 = vpop.f32.mrb[0].mxu0
      %v2712 = vadd.f32 %v2429, %v2711
      %v2713 = vpop.f32.mrb[0].mxu0
      %2714 = vmatprep.mubr.f32.mxu0 0.0
      %2715 = vmatmul.mubr.f32.gmra.mrb[0].mxu0 %v2504
      %v2716 = vpop.f32.mrb[0].mxu0
      %v2717 = vadd.f32 %v2429, %v2716
      %v2718 = vpop.f32.mrb[0].mxu0
      %2719 = vmatprep.mubr.f32.mxu0 0.0
      %2720 = vmatmul.mubr.f32.gmra.mrb[0].mxu0 %v2507
      %v2721 = vpop.f32.mrb[0].mxu0
      %v2722 = vadd.f32 %v2429, %v2721
      %v2723 = vpop.f32.mrb[0].mxu0
      %2724 = vmatprep.mubr.f32.mxu0 0.0
      %2725 = vmatmul.mubr.f32.gmra.mrb[0].mxu0 %v2510
      %v2726 = vpop.f32.mrb[0].mxu0
      %v2727 = vadd.f32 %v2429, %v2726
      %v2728 = vpop.f32.mrb[0].mxu0
      %2729 = vmatprep.mubr.f32.mxu0 0.0
      %2730 = vmatmul.mubr.f32.gmra.mrb[0].mxu0 %v2513
      %v2731 = vpop.f32.mrb[0].mxu0
      %v2732 = vadd.f32 %v2429, %v2731
      %v2733 = vpop.f32.mrb[0].mxu0
      %2734 = vmatprep.mubr.f32.mxu0 0.0
      %2735 = vmatmul.mubr.f32.gmra.mrb[0].mxu0 %v2516
      %v2736 = vpop.f32.mrb[0].mxu0
      %v2737 = vadd.f32 %v2429, %v2736
      %v2738 = vpop.f32.mrb[0].mxu0
      %2739 = vmatprep.mubr.f32.mxu0 0.0
      %2740 = vmatmul.mubr.f32.gmra.mrb[0].mxu0 %v2519
      %v2741 = vpop.f32.mrb[0].mxu0
      %v2742 = vadd.f32 %v2429, %v2741
      %v2743 = vpop.f32.mrb[0].mxu0
      %2744 = vmatprep.mubr.f32.mxu0 0.0
      %2745 = vmatmul.mubr.f32.gmra.mrb[0].mxu0 %v2522
      %v2746 = vpop.f32.mrb[0].mxu0
      %v2747 = vadd.f32 %v2429, %v2746
      %v2748 = vpop.f32.mrb[0].mxu0
      %2749 = vmatprep.mubr.f32.mxu0 0.0
      %2750 = vmatmul.mubr.f32.gmra.mrb[0].mxu0 %v2525
      %v2751 = vpop.f32.mrb[0].mxu0
      %v2752 = vadd.f32 %v2429, %v2751
      %v2753 = vpop.f32.mrb[0].mxu0
      %2754 = vdwg.mxu0
      %v2755 = vmax.f32 %v2597, 0.0
      %v2756 = vmax.f32 %v2602, 0.0
      %v2757 = vmax.f32 %v2607, 0.0
      %v2758 = vmax.f32 %v2612, 0.0
      %v2759 = vmax.f32 %v2617, 0.0
      %v2760 = vmax.f32 %v2622, 0.0
      %v2761 = vmax.f32 %v2627, 0.0
      %v2762 = vmax.f32 %v2632, 0.0
      %v2763 = vmax.f32 %v2637, 0.0
      %v2764 = vmax.f32 %v2642, 0.0
      %v2765 = vmax.f32 %v2647, 0.0
      %v2766 = vmax.f32 %v2652, 0.0
      %v2767 = vmax.f32 %v2657, 0.0
      %v2768 = vmax.f32 %v2662, 0.0
      %v2769 = vmax.f32 %v2667, 0.0
      %v2770 = vmax.f32 %v2672, 0.0
      %v2771 = vmax.f32 %v2677, 0.0
      %v2772 = vmax.f32 %v2682, 0.0
      %v2773 = vmax.f32 %v2687, 0.0
      %v2774 = vmax.f32 %v2692, 0.0
      %v2775 = vmax.f32 %v2697, 0.0
      %v2776 = vmax.f32 %v2702, 0.0
      %v2777 = vmax.f32 %v2707, 0.0
      %v2778 = vmax.f32 %v2712, 0.0
      %v2779 = vmax.f32 %v2717, 0.0
      %v2780 = vmax.f32 %v2722, 0.0
      %v2781 = vmax.f32 %v2727, 0.0
      %v2782 = vmax.f32 %v2732, 0.0
      %v2783 = vmax.f32 %v2737, 0.0
      %v2784 = vmax.f32 %v2742, 0.0
      %v2785 = vmax.f32 %v2747, 0.0
      %v2786 = vmax.f32 %v2752, 0.0
      %2787 = vst.msk [vmem:[%s251] sm:$0xff] %vm292, %v2755
      %2788 = vst.msk [vmem:[%s251 + $0x8] sm:$0xff] %vm292, %v2756
      %2789 = vst.msk [vmem:[%s251 + $0x10] sm:$0xff] %vm292, %v2757
      %2790 = vst.msk [vmem:[%s251 + $0x18] sm:$0xff] %vm292, %v2758
      %2791 = vst.msk [vmem:[%s251 + $0x20] sm:$0xff] %vm292, %v2759
      %2792 = vst.msk [vmem:[%s251 + $0x28] sm:$0xff] %vm292, %v2760
      %2793 = vst.msk [vmem:[%s251 + $0x30] sm:$0xff] %vm292, %v2761
      %2794 = vst.msk [vmem:[%s251 + $0x38] sm:$0xff] %vm292, %v2762
      %2795 = vst.msk [vmem:[%s251 + $0x40] sm:$0xff] %vm292, %v2763
      %2796 = vst.msk [vmem:[%s251 + $0x48] sm:$0xff] %vm292, %v2764
      %2797 = vst.msk [vmem:[%s251 + $0x50] sm:$0xff] %vm292, %v2765
      %2798 = vst.msk [vmem:[%s251 + $0x58] sm:$0xff] %vm292, %v2766
      %2799 = vst.msk [vmem:[%s251 + $0x60] sm:$0xff] %vm292, %v2767
      %2800 = vst.msk [vmem:[%s251 + $0x68] sm:$0xff] %vm292, %v2768
      %2801 = vst.msk [vmem:[%s251 + $0x70] sm:$0xff] %vm292, %v2769
      %2802 = vst.msk [vmem:[%s251 + $0x78] sm:$0xff] %vm292, %v2770
      %2803 = vst.msk [vmem:[%s251 + $0x80] sm:$0xff] %vm292, %v2771
      %2804 = vst.msk [vmem:[%s251 + $0x88] sm:$0xff] %vm292, %v2772
      %2805 = vst.msk [vmem:[%s251 + $0x90] sm:$0xff] %vm292, %v2773
      %2806 = vst.msk [vmem:[%s251 + $0x98] sm:$0xff] %vm292, %v2774
      %2807 = vst.msk [vmem:[%s251 + $0xa0] sm:$0xff] %vm292, %v2775
      %2808 = vst.msk [vmem:[%s251 + $0xa8] sm:$0xff] %vm292, %v2776
      %2809 = vst.msk [vmem:[%s251 + $0xb0] sm:$0xff] %vm292, %v2777
      %2810 = vst.msk [vmem:[%s251 + $0xb8] sm:$0xff] %vm292, %v2778
      %2811 = vst.msk [vmem:[%s251 + $0xc0] sm:$0xff] %vm292, %v2779
      %2812 = vst.msk [vmem:[%s251 + $0xc8] sm:$0xff] %vm292, %v2780
      %2813 = vst.msk [vmem:[%s251 + $0xd0] sm:$0xff] %vm292, %v2781
      %2814 = vst.msk [vmem:[%s251 + $0xd8] sm:$0xff] %vm292, %v2782
      %2815 = vst.msk [vmem:[%s251 + $0xe0] sm:$0xff] %vm292, %v2783
      %2816 = vst.msk [vmem:[%s251 + $0xe8] sm:$0xff] %vm292, %v2784
      %2817 = vst.msk [vmem:[%s251 + $0xf0] sm:$0xff] %vm292, %v2785
      %2818 = vst.msk [vmem:[%s251 + $0xf8] sm:$0xff] %vm292, %v2786
      %p2819 = scmp.lt.s32.totalorder %s17, 1
      %s2820 = scalar_select %p2819, %s17, 1
      %s2821 = smul.addr %s2820, 32
      %s2822 = smul.addr %s2821, 8
      %s2823 = scalar_lea.vmem %s6, %s2822
      // Predicated region
      $region45: #{tpu_custom_call.1} parent=43 // pred_check
        %p2824 = pneg %p166
      $region46: #{tpu_custom_call.1} parent=43 // pred_check_branch
        %2826 = sbr.rel (%p2824) target = $region48
      $region47: #{tpu_custom_call.1} parent=43 // pred_region
        _
      $region48: #{tpu_custom_call.1} parent=43 // pred_fallthru
        _
    $region44: #{tpu_custom_call.1} parent=5 // pred_fallthru
      _
    %p2827 = scmp.le.s32.totalorder 2, %s12
    // Predicated region
    $region49: #{tpu_custom_call.1} parent=5 // pred_check
      %p2828 = pneg %p2827
    $region50: #{tpu_custom_call.1} parent=5 // pred_check_branch
      %2830 = sbr.rel (%p2828) target = $region52
    $region51: #{tpu_custom_call.1} parent=5 // pred_region
      %s2831 = ssub.s32 %s12, 2
      // Predicated region
      $region53: #{tpu_custom_call.1} parent=51 // pred_check
        %p2832 = pneg %p172
      $region54: #{tpu_custom_call.1} parent=51 // pred_check_branch
        %2834 = sbr.rel (%p2832) target = $region56
      $region55: #{tpu_custom_call.1} parent=51 // pred_region
        %p2835 = scmp.lt.s32.totalorder %s18, 1
        %s2836 = scalar_select %p2835, %s18, 1
        %s2837 = smul.addr %s2836, 32
        %s2838 = smul.addr %s2837, 8
        %s2839 = scalar_lea.vmem %s6, %s2838
      $region56: #{tpu_custom_call.1} parent=51 // pred_fallthru
        _
    $region52: #{tpu_custom_call.1} parent=5 // pred_fallthru
      _
  $region6: #{tpu_custom_call.1} parent=0 // loop_footer
    %s16 = sadd.s32 1, %s12
  $region7: #{tpu_custom_call.1} parent=0 // loop_footer_branch
    %11 = sbr.rel target = $region3
  $region8: #{tpu_custom_call.1} parent=0 // loop_exit
    _

</llo_original>
